<compile_context>
chip_gen: v5e
topology: v5e:2x2
jax: 0.10.0
libtpu: 0.0.40
codegen_flags: <defaults>
</compile_context>

<pallas_src>
import functools

import jax
import jax.numpy as jnp
from jax.experimental import pallas as pl
from jax.experimental.pallas import tpu as pltpu


# --------------------------------------------------------------------------
# Layer 1: GATConv(F -> hidden, heads, concat=True) + bias + ELU
# --------------------------------------------------------------------------
def _gat1_kernel(x_full_ref, x_tile_ref, cnt_ref, w1_ref, wa1_ref, b1_ref,
                 z1_ref, *, heads, hidden):
    f32, bf16 = jnp.float32, jnp.bfloat16

    xf = x_full_ref[...].astype(bf16)                      # [N, F]  (all sources)
    xt = x_tile_ref[...].astype(bf16)                      # [T, F]  (dst-row tile)

    # One flat MXU projection for all heads: h1[n, h*C + c].
    # Recomputed per tile (MXU has slack; keeps the "parallel" grid axis
    # megacore-safe instead of a pl.when(pid==0)-filled persistent scratch).
    h1 = jnp.dot(xf, w1_ref[...], preferred_element_type=f32)        # [N, H*C]

    # Folded attention vectors: small matmuls give per-head a_src / a_dst.
    a_full = jnp.dot(xf, wa1_ref[...], preferred_element_type=f32)   # [N, 2H]
    a_tile = jnp.dot(xt, wa1_ref[...], preferred_element_type=f32)   # [T, 2H]
    a_src = a_full[:, :heads].T                            # [H, N]
    a_dst = a_tile[:, heads:].T                            # [H, T]

    # logits[h, d, s] = leaky_relu(a_dst[h, d] + a_src[h, s], 0.2)
    logits = a_dst[:, :, None] + a_src[:, None, :]         # [H, T, N]
    logits = jnp.where(logits > 0, logits, f32(0.2) * logits)

    # Count-weighted softmax over sources.  cnt zeroes masked terms, so the
    # max is taken over the raw logits (saves a [H,T,N] select); duplicate
    # edges count k times and the self-loop keeps the denominator > 0.
    cnt3 = cnt_ref[...].astype(f32)[None, :, :]            # [1, T, N]
    m = jnp.max(logits, axis=-1, keepdims=True)            # [H, T, 1]
    p = jnp.exp(logits - m) * cnt3
    denom = jnp.sum(p, axis=-1, keepdims=True)
    alpha = (p * pl.reciprocal(denom, approx=True)).astype(bf16)     # [H, T, N]
    # attention dropout (p=0.6) is identity at inference.

    # Per-head aggregation from static lane slices of the flat h1, then concat
    # over heads (this is what a batched hds,hsc einsum lowers to anyway).
    h1b = h1.astype(bf16)
    msg = jnp.concatenate(
        [jnp.dot(alpha[h], h1b[:, h * hidden:(h + 1) * hidden],
                 preferred_element_type=f32) for h in range(heads)],
        axis=-1)                                           # [T, H*C]

    z = msg + b1_ref[...]
    z1_ref[...] = jnp.where(z > 0, z, jnp.exp(z) - 1.0)    # F.elu


# --------------------------------------------------------------------------
# Layer 2: GATConv(H*C -> num_classes, 1 head, concat=False) + bias
# --------------------------------------------------------------------------
def _gat2_kernel(z_full_ref, z_tile_ref, cnt_ref, w2_ref, wa2_ref, b2_ref,
                 out_ref):
    f32, bf16 = jnp.float32, jnp.bfloat16

    zf = z_full_ref[...].astype(bf16)                      # [N, H*C]
    zt = z_tile_ref[...].astype(bf16)                      # [T, H*C]

    # Lane-dense padded projection (columns >= num_classes are zero).
    h2 = jnp.dot(zf, w2_ref[...], preferred_element_type=f32)        # [N, P]

    # Folded attention vectors (col 0 = src, col 1 = dst).
    a_full = jnp.dot(zf, wa2_ref[...], preferred_element_type=f32)   # [N, 2]
    a_tile = jnp.dot(zt, wa2_ref[...], preferred_element_type=f32)   # [T, 2]
    a_src = a_full[:, 0:1].T                               # [1, N]
    a_dst = a_tile[:, 1:2]                                 # [T, 1]

    logits = a_dst + a_src                                 # [T, N]
    logits = jnp.where(logits > 0, logits, f32(0.2) * logits)

    cnt = cnt_ref[...].astype(f32)                         # [T, N]
    m = jnp.max(logits, axis=-1, keepdims=True)
    p = jnp.exp(logits - m) * cnt
    denom = jnp.sum(p, axis=-1, keepdims=True)
    alpha = (p * pl.reciprocal(denom, approx=True)).astype(bf16)     # [T, N]

    out_ref[...] = jnp.dot(alpha, h2.astype(bf16),
                           preferred_element_type=f32) + b2_ref[...]  # [T, P]


# --------------------------------------------------------------------------
# Parameters / wrapper
# --------------------------------------------------------------------------
def init_params(key, num_features, hidden_channels, num_classes, heads):
    ks = jax.random.split(key, 9)
    scale = 0.2
    return {
        # gat1: Linear(num_features -> heads*hidden, bias=False) + att + bias
        "w1": scale * jax.random.normal(ks[0], (num_features, heads * hidden_channels), jnp.float32),
        "att_src1": scale * jax.random.normal(ks[1], (heads, hidden_channels), jnp.float32),
        "att_dst1": scale * jax.random.normal(ks[2], (heads, hidden_channels), jnp.float32),
        "b1": scale * jax.random.normal(ks[3], (heads * hidden_channels,), jnp.float32),
        # gat2: Linear(heads*hidden -> num_classes), 1 head, concat=False
        "w2": scale * jax.random.normal(ks[4], (heads * hidden_channels, num_classes), jnp.float32),
        "att_src2": scale * jax.random.normal(ks[5], (1, num_classes), jnp.float32),
        "att_dst2": scale * jax.random.normal(ks[6], (1, num_classes), jnp.float32),
        "b2": scale * jax.random.normal(ks[7], (num_classes,), jnp.float32),
        # edge_embedding: Embedding(4, num_features)
        "edge_emb": scale * jax.random.normal(ks[8], (4, num_features), jnp.float32),
    }


def _pick_tile_dst(n, requested=None, cap=512):
    """Dst-row tile: divides n, sublane-friendly (multiple of 16, bf16-safe),
    capped so the [H, TILE, N] f32 softmax chain stays well inside VMEM.
    TODO(synk): derive `cap` per generation from pltpu.get_tpu_info()
    (v7x: 64 MiB/TC vs 128 MiB on v5e/v6e)."""
    if requested is not None:
        assert n % requested == 0 and (requested % 16 == 0 or requested == n)
        return requested
    t = min(cap, n)
    t -= t % 16
    while t >= 16:
        if n % t == 0:
            return t
        t -= 16
    return n


def recommendation_gat_forward(params, x, edge_index, edge_type, *,
                               hidden_channels, num_classes, heads,
                               tile_dst=None):
    n, f = x.shape
    hc = heads * hidden_channels

    # edge_attr = edge_embedding(edge_type): computed but unused by GATConv
    # (constructed without edge_dim => lin_edge is None in PyG).
    edge_attr = jnp.take(params["edge_emb"], edge_type, axis=0)
    del edge_attr

    # Dense edge-count matrix cnt[dst, src] (multiplicity), bf16 in HBM
    # (exact for multiplicities < 256; halves the only O(N^2) DMA).
    # GATConv(add_self_loops=True): remove existing self-loops, add one each.
    src, dst = edge_index[0], edge_index[1]
    not_self = (src != dst).astype(jnp.float32)
    cnt = jnp.zeros((n, n), jnp.float32).at[dst, src].add(not_self)
    diag = jnp.arange(n)
    cnt = cnt.at[diag, diag].set(1.0).astype(jnp.bfloat16)

    tile = _pick_tile_dst(n, tile_dst)
    num_tiles = n // tile
    grid = (num_tiles,)
    vmem_limit = 64 * 1024 * 1024

    # ---- layer-1 params: bf16 MXU operands, folded attention vectors -------
    w1 = params["w1"]                                        # [F, H*C]
    w1_h = w1.reshape(f, heads, hidden_channels)
    w_as1 = jnp.einsum('fhc,hc->fh', w1_h, params["att_src1"])
    w_ad1 = jnp.einsum('fhc,hc->fh', w1_h, params["att_dst1"])
    wa1 = jnp.concatenate([w_as1, w_ad1], axis=1).astype(jnp.bfloat16)  # [F, 2H]
    w1_bf = w1.astype(jnp.bfloat16)
    b1 = params["b1"].reshape(1, hc)

    cost1 = pl.CostEstimate(
        flops=int(num_tiles * 2 * n * f * (hc + 2 * heads)
                  + 2 * heads * n * n * hidden_channels + 10 * heads * n * n),
        transcendentals=int(heads * n * n + n * hc),
        bytes_accessed=int(2 * n * n + 4 * (num_tiles + 1) * n * f + 4 * n * hc))

    z1 = pl.pallas_call(
        functools.partial(_gat1_kernel, heads=heads, hidden=hidden_channels),
        out_shape=jax.ShapeDtypeStruct((n, hc), jnp.float32),
        grid=grid,
        in_specs=[
            pl.BlockSpec((n, f), lambda i: (0, 0)),            # x, all sources
            pl.BlockSpec((tile, f), lambda i: (i, 0)),         # x, dst-row tile
            pl.BlockSpec((tile, n), lambda i: (i, 0)),         # cnt tile (bf16)
            pl.BlockSpec((f, hc), lambda i: (0, 0)),           # W1 (bf16)
            pl.BlockSpec((f, 2 * heads), lambda i: (0, 0)),    # folded att vecs
            pl.BlockSpec((1, hc), lambda i: (0, 0)),           # bias1
        ],
        out_specs=pl.BlockSpec((tile, hc), lambda i: (i, 0)),
        compiler_params=pltpu.CompilerParams(
            dimension_semantics=("parallel",),
            vmem_limit_bytes=vmem_limit),
        cost_estimate=cost1,
    )(x, x, cnt, w1_bf, wa1, b1)

    # ---- layer-2 params: lane-dense padded W2/bias, folded attention -------
    p_pad = ((num_classes + 127) // 128) * 128
    w2 = params["w2"]                                        # [H*C, nc]
    w2p = (jnp.zeros((hc, p_pad), jnp.float32)
           .at[:, :num_classes].set(w2).astype(jnp.bfloat16))
    wa2 = jnp.stack([w2 @ params["att_src2"][0], w2 @ params["att_dst2"][0]],
                    axis=1).astype(jnp.bfloat16)             # [H*C, 2]
    b2p = (jnp.zeros((1, p_pad), jnp.float32)
           .at[:, :num_classes].set(params["b2"].reshape(1, -1)))

    cost2 = pl.CostEstimate(
        flops=int(num_tiles * 2 * n * hc * (p_pad + 4)
                  + 2 * n * n * p_pad + 8 * n * n),
        transcendentals=int(n * n),
        bytes_accessed=int(2 * n * n + 4 * (num_tiles + 1) * n * hc + 4 * n * p_pad))

    out_padded = pl.pallas_call(
        _gat2_kernel,
        out_shape=jax.ShapeDtypeStruct((n, p_pad), jnp.float32),
        grid=grid,
        in_specs=[
            pl.BlockSpec((n, hc), lambda i: (0, 0)),           # z1, all sources
            pl.BlockSpec((tile, hc), lambda i: (i, 0)),        # z1, dst-row tile
            pl.BlockSpec((tile, n), lambda i: (i, 0)),         # cnt tile (bf16)
            pl.BlockSpec((hc, p_pad), lambda i: (0, 0)),       # W2 padded (bf16)
            pl.BlockSpec((hc, 2), lambda i: (0, 0)),           # folded att vecs
            pl.BlockSpec((1, p_pad), lambda i: (0, 0)),        # bias2 padded
        ],
        out_specs=pl.BlockSpec((tile, p_pad), lambda i: (i, 0)),
        compiler_params=pltpu.CompilerParams(
            dimension_semantics=("parallel",),
            vmem_limit_bytes=vmem_limit),
        cost_estimate=cost2,
    )(z1, z1, cnt, w2p, wa2, b2p)

    return out_padded[:, :num_classes]


if __name__ == "__main__":
    NUM_NODES = 64
    NUM_FEATURES = 16
    HIDDEN_CHANNELS = 8
    NUM_CLASSES = 4
    HEADS = 4
    NUM_EDGES = 128

    key = jax.random.PRNGKey(0)
    k_x, k_src, k_dst, k_type, k_params = jax.random.split(key, 5)

    x = jax.random.normal(k_x, (NUM_NODES, NUM_FEATURES), jnp.float32)
    edge_src = jax.random.randint(k_src, (NUM_EDGES,), 0, NUM_NODES)
    edge_dst = jax.random.randint(k_dst, (NUM_EDGES,), 0, NUM_NODES)
    edge_index = jnp.stack([edge_src, edge_dst], axis=0)          # [2, E]
    edge_type = jax.random.randint(k_type, (NUM_EDGES,), 0, 4)    # [E]

    params = init_params(k_params, NUM_FEATURES, HIDDEN_CHANNELS, NUM_CLASSES, HEADS)

    # tile_dst=32 -> a 2-step dst-row grid at this toy size so the pipelined /
    # megacore-parallel path is actually exercised (auto-pick would use 64).
    fwd = jax.jit(functools.partial(recommendation_gat_forward,
                                    hidden_channels=HIDDEN_CHANNELS,
                                    num_classes=NUM_CLASSES,
                                    heads=HEADS,
                                    tile_dst=32))
    out = fwd(params, x, edge_index, edge_type)
    out = jax.block_until_ready(out)

    assert out.shape == (NUM_NODES, NUM_CLASSES)
    assert bool(jnp.all(jnp.isfinite(out)))
    print("KERNEL_OK")
</pallas_src>

<mosaic_0001>
module attributes {stable_mosaic.version = 11 : i64} {
  func.func @_gat1_kernel(%arg0: i32, %arg1: memref<64x16xf32, #tpu.memory_space<vmem>>, %arg2: memref<32x16xf32, #tpu.memory_space<vmem>>, %arg3: memref<32x64xbf16, #tpu.memory_space<vmem>>, %arg4: memref<16x32xbf16, #tpu.memory_space<vmem>>, %arg5: memref<16x8xbf16, #tpu.memory_space<vmem>>, %arg6: memref<1x32xf32, #tpu.memory_space<vmem>>, %arg7: memref<32x32xf32, #tpu.memory_space<vmem>>) attributes {dimension_semantics = [#tpu.dimension_semantics<parallel>], iteration_bounds = array<i64: 2>, scalar_prefetch = 0 : i64, scratch_operands = 0 : i64, tpu.core_type = #tpu.core_type<tc>, window_params = [{pipeline_mode = #tpu.pipeline_mode<synchronous>, transform_indices = @transform_0, window_bounds = array<i64: 64, 16>}, {transform_indices = @transform_1, window_bounds = array<i64: 32, 16>}, {transform_indices = @transform_2, window_bounds = array<i64: 32, 64>}, {pipeline_mode = #tpu.pipeline_mode<synchronous>, transform_indices = @transform_3, window_bounds = array<i64: 16, 32>}, {pipeline_mode = #tpu.pipeline_mode<synchronous>, transform_indices = @transform_4, window_bounds = array<i64: 16, 8>}, {pipeline_mode = #tpu.pipeline_mode<synchronous>, transform_indices = @transform_5, window_bounds = array<i64: 1, 32>}, {transform_indices = @transform_6, window_bounds = array<i64: 32, 32>}]} {
    %c0 = arith.constant 0 : index
    %c0_0 = arith.constant 0 : index
    %0 = vector.load %arg1[%c0, %c0_0] : memref<64x16xf32, #tpu.memory_space<vmem>>, vector<64x16xf32>
    %1 = arith.truncf %0 : vector<64x16xf32> to vector<64x16xbf16>
    %c0_1 = arith.constant 0 : index
    %c0_2 = arith.constant 0 : index
    %2 = vector.load %arg2[%c0_1, %c0_2] : memref<32x16xf32, #tpu.memory_space<vmem>>, vector<32x16xf32>
    %3 = arith.truncf %2 : vector<32x16xf32> to vector<32x16xbf16>
    %c0_3 = arith.constant 0 : index
    %c0_4 = arith.constant 0 : index
    %4 = vector.load %arg4[%c0_3, %c0_4] : memref<16x32xbf16, #tpu.memory_space<vmem>>, vector<16x32xbf16>
    %cst = arith.constant dense<0.000000e+00> : vector<64x32xf32>
    %5 = tpu.matmul %1, %4, %cst {dimension_numbers = #tpu.dot_dimension_numbers<[1], [0], [0], [1], [0, 0, 1, 1], [], []>} : vector<64x16xbf16>, vector<16x32xbf16>, vector<64x32xf32> -> vector<64x32xf32>
    %c0_5 = arith.constant 0 : index
    %c0_6 = arith.constant 0 : index
    %6 = vector.load %arg5[%c0_5, %c0_6] : memref<16x8xbf16, #tpu.memory_space<vmem>>, vector<16x8xbf16>
    %cst_7 = arith.constant dense<0.000000e+00> : vector<64x8xf32>
    %7 = tpu.matmul %1, %6, %cst_7 {dimension_numbers = #tpu.dot_dimension_numbers<[1], [0], [0], [1], [0, 0, 1, 1], [], []>} : vector<64x16xbf16>, vector<16x8xbf16>, vector<64x8xf32> -> vector<64x8xf32>
    %c0_8 = arith.constant 0 : index
    %c0_9 = arith.constant 0 : index
    %8 = vector.load %arg5[%c0_8, %c0_9] : memref<16x8xbf16, #tpu.memory_space<vmem>>, vector<16x8xbf16>
    %cst_10 = arith.constant dense<0.000000e+00> : vector<32x8xf32>
    %9 = tpu.matmul %3, %8, %cst_10 {dimension_numbers = #tpu.dot_dimension_numbers<[1], [0], [0], [1], [0, 0, 1, 1], [], []>} : vector<32x16xbf16>, vector<16x8xbf16>, vector<32x8xf32> -> vector<32x8xf32>
    %10 = vector.extract_strided_slice %7 {offsets = [0, 0], sizes = [64, 4], strides = [1, 1]} : vector<64x8xf32> to vector<64x4xf32>
    %11 = tpu.transpose %10, [1, 0] : vector<64x4xf32> -> vector<4x64xf32>
    %12 = vector.extract_strided_slice %9 {offsets = [0, 4], sizes = [32, 4], strides = [1, 1]} : vector<32x8xf32> to vector<32x4xf32>
    %13 = tpu.transpose %12, [1, 0] : vector<32x4xf32> -> vector<4x32xf32>
    %14 = vector.shape_cast %13 : vector<4x32xf32> to vector<4x32x1xf32>
    %15 = vector.shape_cast %11 : vector<4x64xf32> to vector<4x1x64xf32>
    %16 = vector.broadcast %14 : vector<4x32x1xf32> to vector<4x32x64xf32>
    %17 = vector.broadcast %15 : vector<4x1x64xf32> to vector<4x32x64xf32>
    %18 = arith.addf %16, %17 : vector<4x32x64xf32>
    %cst_11 = arith.constant 0.000000e+00 : f32
    %19 = vector.broadcast %cst_11 : f32 to vector<4x32x64xf32>
    %20 = arith.cmpf ogt, %18, %19 : vector<4x32x64xf32>
    %cst_12 = arith.constant 2.000000e-01 : f32
    %21 = vector.broadcast %cst_12 : f32 to vector<4x32x64xf32>
    %22 = arith.mulf %21, %18 : vector<4x32x64xf32>
    %23 = arith.select %20, %18, %22 : vector<4x32x64xi1>, vector<4x32x64xf32>
    %c0_13 = arith.constant 0 : index
    %c0_14 = arith.constant 0 : index
    %24 = vector.load %arg3[%c0_13, %c0_14] : memref<32x64xbf16, #tpu.memory_space<vmem>>, vector<32x64xbf16>
    %25 = arith.extf %24 : vector<32x64xbf16> to vector<32x64xf32>
    %26 = vector.shape_cast %25 : vector<32x64xf32> to vector<1x32x64xf32>
    %cst_15 = arith.constant dense<0xFF800000> : vector<4x32xf32>
    %27 = vector.multi_reduction <maximumf>, %23, %cst_15 [2] : vector<4x32x64xf32> to vector<4x32xf32>
    %28 = vector.shape_cast %27 : vector<4x32xf32> to vector<4x32x1xf32>
    %29 = vector.broadcast %28 : vector<4x32x1xf32> to vector<4x32x64xf32>
    %30 = arith.subf %23, %29 : vector<4x32x64xf32>
    %31 = math.exp %30 : vector<4x32x64xf32>
    %32 = vector.broadcast %26 : vector<1x32x64xf32> to vector<4x32x64xf32>
    %33 = arith.mulf %31, %32 : vector<4x32x64xf32>
    %cst_16 = arith.constant dense<0.000000e+00> : vector<4x32xf32>
    %34 = vector.multi_reduction <add>, %33, %cst_16 [2] : vector<4x32x64xf32> to vector<4x32xf32>
    %35 = vector.shape_cast %34 : vector<4x32xf32> to vector<4x32x1xf32>
    %36 = tpu.reciprocal %35 {approx = true} : vector<4x32x1xf32> -> vector<4x32x1xf32>
    %37 = vector.broadcast %36 : vector<4x32x1xf32> to vector<4x32x64xf32>
    %38 = arith.mulf %33, %37 : vector<4x32x64xf32>
    %39 = arith.truncf %38 : vector<4x32x64xf32> to vector<4x32x64xbf16>
    %40 = arith.truncf %5 : vector<64x32xf32> to vector<64x32xbf16>
    %41 = vector.extract_strided_slice %39 {offsets = [0, 0, 0], sizes = [1, 32, 64], strides = [1, 1, 1]} : vector<4x32x64xbf16> to vector<1x32x64xbf16>
    %42 = vector.shape_cast %41 : vector<1x32x64xbf16> to vector<32x64xbf16>
    %43 = vector.extract_strided_slice %40 {offsets = [0, 0], sizes = [64, 8], strides = [1, 1]} : vector<64x32xbf16> to vector<64x8xbf16>
    %cst_17 = arith.constant dense<0.000000e+00> : vector<32x8xf32>
    %44 = tpu.matmul %42, %43, %cst_17 {dimension_numbers = #tpu.dot_dimension_numbers<[1], [0], [0], [1], [0, 0, 1, 1], [], []>} : vector<32x64xbf16>, vector<64x8xbf16>, vector<32x8xf32> -> vector<32x8xf32>
    %45 = vector.extract_strided_slice %39 {offsets = [1, 0, 0], sizes = [1, 32, 64], strides = [1, 1, 1]} : vector<4x32x64xbf16> to vector<1x32x64xbf16>
    %46 = vector.shape_cast %45 : vector<1x32x64xbf16> to vector<32x64xbf16>
    %47 = vector.extract_strided_slice %40 {offsets = [0, 8], sizes = [64, 8], strides = [1, 1]} : vector<64x32xbf16> to vector<64x8xbf16>
    %cst_18 = arith.constant dense<0.000000e+00> : vector<32x8xf32>
    %48 = tpu.matmul %46, %47, %cst_18 {dimension_numbers = #tpu.dot_dimension_numbers<[1], [0], [0], [1], [0, 0, 1, 1], [], []>} : vector<32x64xbf16>, vector<64x8xbf16>, vector<32x8xf32> -> vector<32x8xf32>
    %49 = vector.extract_strided_slice %39 {offsets = [2, 0, 0], sizes = [1, 32, 64], strides = [1, 1, 1]} : vector<4x32x64xbf16> to vector<1x32x64xbf16>
    %50 = vector.shape_cast %49 : vector<1x32x64xbf16> to vector<32x64xbf16>
    %51 = vector.extract_strided_slice %40 {offsets = [0, 16], sizes = [64, 8], strides = [1, 1]} : vector<64x32xbf16> to vector<64x8xbf16>
    %cst_19 = arith.constant dense<0.000000e+00> : vector<32x8xf32>
    %52 = tpu.matmul %50, %51, %cst_19 {dimension_numbers = #tpu.dot_dimension_numbers<[1], [0], [0], [1], [0, 0, 1, 1], [], []>} : vector<32x64xbf16>, vector<64x8xbf16>, vector<32x8xf32> -> vector<32x8xf32>
    %53 = vector.extract_strided_slice %39 {offsets = [3, 0, 0], sizes = [1, 32, 64], strides = [1, 1, 1]} : vector<4x32x64xbf16> to vector<1x32x64xbf16>
    %54 = vector.shape_cast %53 : vector<1x32x64xbf16> to vector<32x64xbf16>
    %55 = vector.extract_strided_slice %40 {offsets = [0, 24], sizes = [64, 8], strides = [1, 1]} : vector<64x32xbf16> to vector<64x8xbf16>
    %cst_20 = arith.constant dense<0.000000e+00> : vector<32x8xf32>
    %56 = tpu.matmul %54, %55, %cst_20 {dimension_numbers = #tpu.dot_dimension_numbers<[1], [0], [0], [1], [0, 0, 1, 1], [], []>} : vector<32x64xbf16>, vector<64x8xbf16>, vector<32x8xf32> -> vector<32x8xf32>
    %57 = tpu.concatenate %44, %48, %52, %56 in 1 : vector<32x8xf32>, vector<32x8xf32>, vector<32x8xf32>, vector<32x8xf32> -> vector<32x32xf32>
    %c0_21 = arith.constant 0 : index
    %c0_22 = arith.constant 0 : index
    %58 = vector.load %arg6[%c0_21, %c0_22] : memref<1x32xf32, #tpu.memory_space<vmem>>, vector<1x32xf32>
    %59 = vector.broadcast %58 : vector<1x32xf32> to vector<32x32xf32>
    %60 = arith.addf %57, %59 : vector<32x32xf32>
    %cst_23 = arith.constant 0.000000e+00 : f32
    %61 = vector.broadcast %cst_23 : f32 to vector<32x32xf32>
    %62 = arith.cmpf ogt, %60, %61 : vector<32x32xf32>
    %63 = math.exp %60 : vector<32x32xf32>
    %cst_24 = arith.constant 1.000000e+00 : f32
    %64 = vector.broadcast %cst_24 : f32 to vector<32x32xf32>
    %65 = arith.subf %63, %64 : vector<32x32xf32>
    %66 = arith.select %62, %60, %65 : vector<32x32xi1>, vector<32x32xf32>
    %c0_25 = arith.constant 0 : index
    %c0_26 = arith.constant 0 : index
    %67 = vector.load %arg7[%c0_25, %c0_26] : memref<32x32xf32, #tpu.memory_space<vmem>>, vector<32x32xf32>
    tpu.vector_store %arg7[%c0_25, %c0_26], %66 {strides = array<i32>} : memref<32x32xf32, #tpu.memory_space<vmem>>, vector<32x32xf32>,
    return
  }
  func.func @transform_0(%arg0: i32) -> (i32, i32) {
    %c0_i32 = arith.constant 0 : i32
    %c0_i32_0 = arith.constant 0 : i32
    %c0_i32_1 = arith.constant 0 : i32
    return %c0_i32, %c0_i32_0 : i32, i32
  }
  func.func @transform_1(%arg0: i32) -> (i32, i32) {
    %c0_i32 = arith.constant 0 : i32
    %c0_i32_0 = arith.constant 0 : i32
    return %arg0, %c0_i32 : i32, i32
  }
  func.func @transform_2(%arg0: i32) -> (i32, i32) {
    %c0_i32 = arith.constant 0 : i32
    %c0_i32_0 = arith.constant 0 : i32
    return %arg0, %c0_i32 : i32, i32
  }
  func.func @transform_3(%arg0: i32) -> (i32, i32) {
    %c0_i32 = arith.constant 0 : i32
    %c0_i32_0 = arith.constant 0 : i32
    %c0_i32_1 = arith.constant 0 : i32
    return %c0_i32, %c0_i32_0 : i32, i32
  }
  func.func @transform_4(%arg0: i32) -> (i32, i32) {
    %c0_i32 = arith.constant 0 : i32
    %c0_i32_0 = arith.constant 0 : i32
    %c0_i32_1 = arith.constant 0 : i32
    return %c0_i32, %c0_i32_0 : i32, i32
  }
  func.func @transform_5(%arg0: i32) -> (i32, i32) {
    %c0_i32 = arith.constant 0 : i32
    %c0_i32_0 = arith.constant 0 : i32
    %c0_i32_1 = arith.constant 0 : i32
    return %c0_i32, %c0_i32_0 : i32, i32
  }
  func.func @transform_6(%arg0: i32) -> (i32, i32) {
    %c0_i32 = arith.constant 0 : i32
    %c0_i32_0 = arith.constant 0 : i32
    return %arg0, %c0_i32 : i32, i32
  }
}

module attributes {stable_mosaic.version = 11 : i64} {
  func.func @_gat2_kernel(%arg0: i32, %arg1: memref<64x32xf32, #tpu.memory_space<vmem>>, %arg2: memref<32x32xf32, #tpu.memory_space<vmem>>, %arg3: memref<32x64xbf16, #tpu.memory_space<vmem>>, %arg4: memref<32x128xbf16, #tpu.memory_space<vmem>>, %arg5: memref<32x2xbf16, #tpu.memory_space<vmem>>, %arg6: memref<1x128xf32, #tpu.memory_space<vmem>>, %arg7: memref<32x128xf32, #tpu.memory_space<vmem>>) attributes {dimension_semantics = [#tpu.dimension_semantics<parallel>], iteration_bounds = array<i64: 2>, scalar_prefetch = 0 : i64, scratch_operands = 0 : i64, tpu.core_type = #tpu.core_type<tc>, window_params = [{pipeline_mode = #tpu.pipeline_mode<synchronous>, transform_indices = @transform_0, window_bounds = array<i64: 64, 32>}, {transform_indices = @transform_1, window_bounds = array<i64: 32, 32>}, {transform_indices = @transform_2, window_bounds = array<i64: 32, 64>}, {pipeline_mode = #tpu.pipeline_mode<synchronous>, transform_indices = @transform_3, window_bounds = array<i64: 32, 128>}, {pipeline_mode = #tpu.pipeline_mode<synchronous>, transform_indices = @transform_4, window_bounds = array<i64: 32, 2>}, {pipeline_mode = #tpu.pipeline_mode<synchronous>, transform_indices = @transform_5, window_bounds = array<i64: 1, 128>}, {transform_indices = @transform_6, window_bounds = array<i64: 32, 128>}]} {
    %c0 = arith.constant 0 : index
    %c0_0 = arith.constant 0 : index
    %0 = vector.load %arg1[%c0, %c0_0] : memref<64x32xf32, #tpu.memory_space<vmem>>, vector<64x32xf32>
    %1 = arith.truncf %0 : vector<64x32xf32> to vector<64x32xbf16>
    %c0_1 = arith.constant 0 : index
    %c0_2 = arith.constant 0 : index
    %2 = vector.load %arg2[%c0_1, %c0_2] : memref<32x32xf32, #tpu.memory_space<vmem>>, vector<32x32xf32>
    %3 = arith.truncf %2 : vector<32x32xf32> to vector<32x32xbf16>
    %c0_3 = arith.constant 0 : index
    %c0_4 = arith.constant 0 : index
    %4 = vector.load %arg4[%c0_3, %c0_4] : memref<32x128xbf16, #tpu.memory_space<vmem>>, vector<32x128xbf16>
    %cst = arith.constant dense<0.000000e+00> : vector<64x128xf32>
    %5 = tpu.matmul %1, %4, %cst {dimension_numbers = #tpu.dot_dimension_numbers<[1], [0], [0], [1], [0, 0, 1, 1], [], []>} : vector<64x32xbf16>, vector<32x128xbf16>, vector<64x128xf32> -> vector<64x128xf32>
    %c0_5 = arith.constant 0 : index
    %c0_6 = arith.constant 0 : index
    %6 = vector.load %arg5[%c0_5, %c0_6] : memref<32x2xbf16, #tpu.memory_space<vmem>>, vector<32x2xbf16>
    %cst_7 = arith.constant dense<0.000000e+00> : vector<64x2xf32>
    %7 = tpu.matmul %1, %6, %cst_7 {dimension_numbers = #tpu.dot_dimension_numbers<[1], [0], [0], [1], [0, 0, 1, 1], [], []>} : vector<64x32xbf16>, vector<32x2xbf16>, vector<64x2xf32> -> vector<64x2xf32>
    %c0_8 = arith.constant 0 : index
    %c0_9 = arith.constant 0 : index
    %8 = vector.load %arg5[%c0_8, %c0_9] : memref<32x2xbf16, #tpu.memory_space<vmem>>, vector<32x2xbf16>
    %cst_10 = arith.constant dense<0.000000e+00> : vector<32x2xf32>
    %9 = tpu.matmul %3, %8, %cst_10 {dimension_numbers = #tpu.dot_dimension_numbers<[1], [0], [0], [1], [0, 0, 1, 1], [], []>} : vector<32x32xbf16>, vector<32x2xbf16>, vector<32x2xf32> -> vector<32x2xf32>
    %10 = vector.extract_strided_slice %7 {offsets = [0, 0], sizes = [64, 1], strides = [1, 1]} : vector<64x2xf32> to vector<64x1xf32>
    %11 = tpu.transpose %10, [1, 0] : vector<64x1xf32> -> vector<1x64xf32>
    %12 = vector.extract_strided_slice %9 {offsets = [0, 1], sizes = [32, 1], strides = [1, 1]} : vector<32x2xf32> to vector<32x1xf32>
    %13 = vector.broadcast %12 : vector<32x1xf32> to vector<32x64xf32>
    %14 = vector.broadcast %11 : vector<1x64xf32> to vector<32x64xf32>
    %15 = arith.addf %13, %14 : vector<32x64xf32>
    %cst_11 = arith.constant 0.000000e+00 : f32
    %16 = vector.broadcast %cst_11 : f32 to vector<32x64xf32>
    %17 = arith.cmpf ogt, %15, %16 : vector<32x64xf32>
    %cst_12 = arith.constant 2.000000e-01 : f32
    %18 = vector.broadcast %cst_12 : f32 to vector<32x64xf32>
    %19 = arith.mulf %18, %15 : vector<32x64xf32>
    %20 = arith.select %17, %15, %19 : vector<32x64xi1>, vector<32x64xf32>
    %c0_13 = arith.constant 0 : index
    %c0_14 = arith.constant 0 : index
    %21 = vector.load %arg3[%c0_13, %c0_14] : memref<32x64xbf16, #tpu.memory_space<vmem>>, vector<32x64xbf16>
    %22 = arith.extf %21 : vector<32x64xbf16> to vector<32x64xf32>
    %cst_15 = arith.constant dense<0xFF800000> : vector<32xf32>
    %23 = vector.multi_reduction <maximumf>, %20, %cst_15 [1] : vector<32x64xf32> to vector<32xf32>
    %24 = vector.shape_cast %23 : vector<32xf32> to vector<32x1xf32>
    %25 = vector.broadcast %24 : vector<32x1xf32> to vector<32x64xf32>
    %26 = arith.subf %20, %25 : vector<32x64xf32>
    %27 = math.exp %26 : vector<32x64xf32>
    %28 = arith.mulf %27, %22 : vector<32x64xf32>
    %cst_16 = arith.constant dense<0.000000e+00> : vector<32xf32>
    %29 = vector.multi_reduction <add>, %28, %cst_16 [1] : vector<32x64xf32> to vector<32xf32>
    %30 = vector.shape_cast %29 : vector<32xf32> to vector<32x1xf32>
    %31 = tpu.reciprocal %30 {approx = true} : vector<32x1xf32> -> vector<32x1xf32>
    %32 = vector.broadcast %31 : vector<32x1xf32> to vector<32x64xf32>
    %33 = arith.mulf %28, %32 : vector<32x64xf32>
    %34 = arith.truncf %33 : vector<32x64xf32> to vector<32x64xbf16>
    %35 = arith.truncf %5 : vector<64x128xf32> to vector<64x128xbf16>
    %cst_17 = arith.constant dense<0.000000e+00> : vector<32x128xf32>
    %36 = tpu.matmul %34, %35, %cst_17 {dimension_numbers = #tpu.dot_dimension_numbers<[1], [0], [0], [1], [0, 0, 1, 1], [], []>} : vector<32x64xbf16>, vector<64x128xbf16>, vector<32x128xf32> -> vector<32x128xf32>
    %c0_18 = arith.constant 0 : index
    %c0_19 = arith.constant 0 : index
    %37 = vector.load %arg6[%c0_18, %c0_19] : memref<1x128xf32, #tpu.memory_space<vmem>>, vector<1x128xf32>
    %38 = vector.broadcast %37 : vector<1x128xf32> to vector<32x128xf32>
    %39 = arith.addf %36, %38 : vector<32x128xf32>
    %c0_20 = arith.constant 0 : index
    %c0_21 = arith.constant 0 : index
    %40 = vector.load %arg7[%c0_20, %c0_21] : memref<32x128xf32, #tpu.memory_space<vmem>>, vector<32x128xf32>
    tpu.vector_store %arg7[%c0_20, %c0_21], %39 {strides = array<i32>} : memref<32x128xf32, #tpu.memory_space<vmem>>, vector<32x128xf32>,
    return
  }
  func.func @transform_0(%arg0: i32) -> (i32, i32) {
    %c0_i32 = arith.constant 0 : i32
    %c0_i32_0 = arith.constant 0 : i32
    %c0_i32_1 = arith.constant 0 : i32
    return %c0_i32, %c0_i32_0 : i32, i32
  }
  func.func @transform_1(%arg0: i32) -> (i32, i32) {
    %c0_i32 = arith.constant 0 : i32
    %c0_i32_0 = arith.constant 0 : i32
    return %arg0, %c0_i32 : i32, i32
  }
  func.func @transform_2(%arg0: i32) -> (i32, i32) {
    %c0_i32 = arith.constant 0 : i32
    %c0_i32_0 = arith.constant 0 : i32
    return %arg0, %c0_i32 : i32, i32
  }
  func.func @transform_3(%arg0: i32) -> (i32, i32) {
    %c0_i32 = arith.constant 0 : i32
    %c0_i32_0 = arith.constant 0 : i32
    %c0_i32_1 = arith.constant 0 : i32
    return %c0_i32, %c0_i32_0 : i32, i32
  }
  func.func @transform_4(%arg0: i32) -> (i32, i32) {
    %c0_i32 = arith.constant 0 : i32
    %c0_i32_0 = arith.constant 0 : i32
    %c0_i32_1 = arith.constant 0 : i32
    return %c0_i32, %c0_i32_0 : i32, i32
  }
  func.func @transform_5(%arg0: i32) -> (i32, i32) {
    %c0_i32 = arith.constant 0 : i32
    %c0_i32_0 = arith.constant 0 : i32
    %c0_i32_1 = arith.constant 0 : i32
    return %c0_i32, %c0_i32_0 : i32, i32
  }
  func.func @transform_6(%arg0: i32) -> (i32, i32) {
    %c0_i32 = arith.constant 0 : i32
    %c0_i32_0 = arith.constant 0 : i32
    return %arg0, %c0_i32 : i32, i32
  }
}

</mosaic_0001>

<llo_original>
// kernel: recommendation_gat_forward.3
$region0: #{recommendation_gat_forward.3}
  #allocation0 [shape = 'u32[]', space=smem, size = 0x4, offset = 0x4, fixed_abs, tag = 'smem constant byte address 0x4 - core index']
  #allocation1 [shape = 'u32[72,128]{1,0:T(1,128)}', space=vmem, size = 0x9000, scoped, tag = 'internal scratch']
  %s0 = inlined_call_operand.vmem [shape: f32[64,32], index: 0, kind: input, shape index: {}, may-alias: {0,1}]
  %s1 = inlined_call_operand.vmem [shape: f32[64,32], index: 1, kind: input, shape index: {}, may-alias: {0,1}]
  %s2 = inlined_call_operand.vmem [shape: bf16[64,64], index: 2, kind: input, shape index: {}]
  %s3 = inlined_call_operand.vmem [shape: bf16[32,128], index: 3, kind: input, shape index: {}]
  %s4 = inlined_call_operand.vmem [shape: bf16[32,2], index: 4, kind: input, shape index: {}]
  %s5 = inlined_call_operand.vmem [shape: f32[1,128], index: 5, kind: input, shape index: {}]
  %s6 = inlined_call_operand.vmem [shape: f32[64,128], index: 6, kind: output, shape index: {}]
  %s7 = sld [smem:[#allocation0]]
  $region57: #{recommendation_gat_forward.3} parent=0
    _
  %s9 = ssub.s32 1, %s7
  %s10 = scalar_select 0, %s9, %s7
  loop: start=0, step=1, limit=4
  $region2: #{recommendation_gat_forward.3} parent=0 // loop_pre_header
    _
  $region3: #{recommendation_gat_forward.3} parent=0 // loop_header
    %s12 = sphi 0, %s16
    %p13 = scmp.ge.s32.totalorder %s12, 4
    %s20 = sphi 0, %s20
    %s22 = sphi 0, %s20
    %s23 = sphi 0, %s22
    %s37 = sphi 0, %s23
    %s43 = sphi 0, %s45
    %s46 = sphi 0, %s43
    %s47 = sphi 0, %s46
    %s63 = sphi 0, %s47
    %s69 = sphi 0, %s71
    %s72 = sphi 0, %s69
    %s73 = sphi 0, %s72
    %s89 = sphi 0, %s73
    %s93 = sphi 0, %s93
    %s95 = sphi 0, %s93
    %s96 = sphi 0, %s95
    %s110 = sphi 0, %s96
    %s114 = sphi 0, %s114
    %s116 = sphi 0, %s114
    %s117 = sphi 0, %s116
    %s131 = sphi 0, %s117
    %s135 = sphi 0, %s135
    %s137 = sphi 0, %s135
    %s138 = sphi 0, %s137
    %s152 = sphi 0, %s138
    %s158 = sphi 0, %s160
    %s161 = sphi 0, %s158
    %s162 = sphi 0, %s161
    %s178 = sphi 0, %s162
  $region4: #{recommendation_gat_forward.3} parent=0 // loop_header_branch
    %15 = sbr.rel (%p13) target = $region8
  $region5: #{recommendation_gat_forward.3} parent=0 // loop_body
    %s17 = ssub.s32 %s12, 1
    %s18 = ssub.s32 %s12, 2
    %s19 = sadd.s32 %s12, 1
    %s21 = sadd.s32 %s20, 1
    %p24 = scmp.eq.s32.totalorder %s12, 1
    %p25 = scmp.ne.s32.totalorder %s20, %s22
    %p26 = scmp.eq.s32.totalorder %s12, 0
    %p27 = por %p25, %p26
    %p28 = scmp.ne.s32.totalorder %s20, %s22
    %p29 = scmp.eq.s32.totalorder %s17, 1
    %p30 = por %p28, %p29
    %p31 = scmp.ne.s32.totalorder %s22, %s23
    %p32 = scmp.eq.s32.totalorder %s17, 0
    %p33 = por %p31, %p32
    %p34 = scmp.ne.s32.totalorder %s22, %s23
    %p35 = scmp.eq.s32.totalorder %s18, 1
    %p36 = por %p34, %p35
    %p38 = scmp.ne.s32.totalorder %s23, %s37
    %p39 = scmp.eq.s32.totalorder %s18, 0
    %p40 = por %p38, %p39
    %s41 = ssub.s32 %s12, %s19
    %p42 = scmp.eq.s32.totalorder %s41, 0
    %s44 = sadd.s32 %s43, 1
    %s45 = scalar_select %p42, %s43, %s44
    %p48 = pneg %p42
    %p49 = scmp.eq.s32.totalorder %s12, 1
    %p50 = por %p48, %p49
    %p51 = scmp.ne.s32.totalorder %s43, %s46
    %p52 = scmp.eq.s32.totalorder %s12, 0
    %p53 = por %p51, %p52
    %p54 = scmp.ne.s32.totalorder %s43, %s46
    %p55 = scmp.eq.s32.totalorder %s17, 1
    %p56 = por %p54, %p55
    %p57 = scmp.ne.s32.totalorder %s46, %s47
    %p58 = scmp.eq.s32.totalorder %s17, 0
    %p59 = por %p57, %p58
    %p60 = scmp.ne.s32.totalorder %s46, %s47
    %p61 = scmp.eq.s32.totalorder %s18, 1
    %p62 = por %p60, %p61
    %p64 = scmp.ne.s32.totalorder %s47, %s63
    %p65 = scmp.eq.s32.totalorder %s18, 0
    %p66 = por %p64, %p65
    %s67 = ssub.s32 %s12, %s19
    %p68 = scmp.eq.s32.totalorder %s67, 0
    %s70 = sadd.s32 %s69, 1
    %s71 = scalar_select %p68, %s69, %s70
    %p74 = pneg %p68
    %p75 = scmp.eq.s32.totalorder %s12, 1
    %p76 = por %p74, %p75
    %p77 = scmp.ne.s32.totalorder %s69, %s72
    %p78 = scmp.eq.s32.totalorder %s12, 0
    %p79 = por %p77, %p78
    %p80 = scmp.ne.s32.totalorder %s69, %s72
    %p81 = scmp.eq.s32.totalorder %s17, 1
    %p82 = por %p80, %p81
    %p83 = scmp.ne.s32.totalorder %s72, %s73
    %p84 = scmp.eq.s32.totalorder %s17, 0
    %p85 = por %p83, %p84
    %p86 = scmp.ne.s32.totalorder %s72, %s73
    %p87 = scmp.eq.s32.totalorder %s18, 1
    %p88 = por %p86, %p87
    %p90 = scmp.ne.s32.totalorder %s73, %s89
    %p91 = scmp.eq.s32.totalorder %s18, 0
    %p92 = por %p90, %p91
    %s94 = sadd.s32 %s93, 1
    %p97 = scmp.eq.s32.totalorder %s12, 1
    %p98 = scmp.ne.s32.totalorder %s93, %s95
    %p99 = scmp.eq.s32.totalorder %s12, 0
    %p100 = por %p98, %p99
    %p101 = scmp.ne.s32.totalorder %s93, %s95
    %p102 = scmp.eq.s32.totalorder %s17, 1
    %p103 = por %p101, %p102
    %p104 = scmp.ne.s32.totalorder %s95, %s96
    %p105 = scmp.eq.s32.totalorder %s17, 0
    %p106 = por %p104, %p105
    %p107 = scmp.ne.s32.totalorder %s95, %s96
    %p108 = scmp.eq.s32.totalorder %s18, 1
    %p109 = por %p107, %p108
    %p111 = scmp.ne.s32.totalorder %s96, %s110
    %p112 = scmp.eq.s32.totalorder %s18, 0
    %p113 = por %p111, %p112
    %s115 = sadd.s32 %s114, 1
    %p118 = scmp.eq.s32.totalorder %s12, 1
    %p119 = scmp.ne.s32.totalorder %s114, %s116
    %p120 = scmp.eq.s32.totalorder %s12, 0
    %p121 = por %p119, %p120
    %p122 = scmp.ne.s32.totalorder %s114, %s116
    %p123 = scmp.eq.s32.totalorder %s17, 1
    %p124 = por %p122, %p123
    %p125 = scmp.ne.s32.totalorder %s116, %s117
    %p126 = scmp.eq.s32.totalorder %s17, 0
    %p127 = por %p125, %p126
    %p128 = scmp.ne.s32.totalorder %s116, %s117
    %p129 = scmp.eq.s32.totalorder %s18, 1
    %p130 = por %p128, %p129
    %p132 = scmp.ne.s32.totalorder %s117, %s131
    %p133 = scmp.eq.s32.totalorder %s18, 0
    %p134 = por %p132, %p133
    %s136 = sadd.s32 %s135, 1
    %p139 = scmp.eq.s32.totalorder %s12, 1
    %p140 = scmp.ne.s32.totalorder %s135, %s137
    %p141 = scmp.eq.s32.totalorder %s12, 0
    %p142 = por %p140, %p141
    %p143 = scmp.ne.s32.totalorder %s135, %s137
    %p144 = scmp.eq.s32.totalorder %s17, 1
    %p145 = por %p143, %p144
    %p146 = scmp.ne.s32.totalorder %s137, %s138
    %p147 = scmp.eq.s32.totalorder %s17, 0
    %p148 = por %p146, %p147
    %p149 = scmp.ne.s32.totalorder %s137, %s138
    %p150 = scmp.eq.s32.totalorder %s18, 1
    %p151 = por %p149, %p150
    %p153 = scmp.ne.s32.totalorder %s138, %s152
    %p154 = scmp.eq.s32.totalorder %s18, 0
    %p155 = por %p153, %p154
    %s156 = ssub.s32 %s12, %s19
    %p157 = scmp.eq.s32.totalorder %s156, 0
    %s159 = sadd.s32 %s158, 1
    %s160 = scalar_select %p157, %s158, %s159
    %p163 = pneg %p157
    %p164 = scmp.eq.s32.totalorder %s12, 1
    %p165 = por %p163, %p164
    %p166 = scmp.ne.s32.totalorder %s158, %s161
    %p167 = scmp.eq.s32.totalorder %s12, 0
    %p168 = por %p166, %p167
    %p169 = scmp.ne.s32.totalorder %s158, %s161
    %p170 = scmp.eq.s32.totalorder %s17, 1
    %p171 = por %p169, %p170
    %p172 = scmp.ne.s32.totalorder %s161, %s162
    %p173 = scmp.eq.s32.totalorder %s17, 0
    %p174 = por %p172, %p173
    %p175 = scmp.ne.s32.totalorder %s161, %s162
    %p176 = scmp.eq.s32.totalorder %s18, 1
    %p177 = por %p175, %p176
    %p179 = scmp.ne.s32.totalorder %s162, %s178
    %p180 = scmp.eq.s32.totalorder %s18, 0
    %p181 = por %p179, %p180
    %p182 = scmp.le.s32.totalorder 1, %s12
    %p183 = scmp.lt.s32.totalorder %s12, 3
    %p184 = pnand %p182, %p183
    %p185 = pneg %p184
    // Predicated region
    $region9: #{recommendation_gat_forward.3} parent=5 // pred_check
      _
    $region10: #{recommendation_gat_forward.3} parent=5 // pred_check_branch
      %187 = sbr.rel (%p184) target = $region12
    $region11: #{recommendation_gat_forward.3} parent=5 // pred_region
      %s188 = ssub.s32 %s12, 1
      // Predicated region
      $region13: #{recommendation_gat_forward.3} parent=11 // pred_check
        %p189 = pneg %p33
      $region14: #{recommendation_gat_forward.3} parent=11 // pred_check_branch
        %191 = sbr.rel (%p189) target = $region16
      $region15: #{recommendation_gat_forward.3} parent=11 // pred_region
        _
      $region16: #{recommendation_gat_forward.3} parent=11 // pred_fallthru
        _
      // Predicated region
      $region17: #{recommendation_gat_forward.3} parent=11 // pred_check
        %p192 = pneg %p106
      $region18: #{recommendation_gat_forward.3} parent=11 // pred_check_branch
        %194 = sbr.rel (%p192) target = $region20
      $region19: #{recommendation_gat_forward.3} parent=11 // pred_region
        _
      $region20: #{recommendation_gat_forward.3} parent=11 // pred_fallthru
        _
      // Predicated region
      $region21: #{recommendation_gat_forward.3} parent=11 // pred_check
        %p195 = pneg %p127
      $region22: #{recommendation_gat_forward.3} parent=11 // pred_check_branch
        %197 = sbr.rel (%p195) target = $region24
      $region23: #{recommendation_gat_forward.3} parent=11 // pred_region
        _
      $region24: #{recommendation_gat_forward.3} parent=11 // pred_fallthru
        _
      // Predicated region
      $region25: #{recommendation_gat_forward.3} parent=11 // pred_check
        %p198 = pneg %p148
      $region26: #{recommendation_gat_forward.3} parent=11 // pred_check_branch
        %200 = sbr.rel (%p198) target = $region28
      $region27: #{recommendation_gat_forward.3} parent=11 // pred_region
        _
      $region28: #{recommendation_gat_forward.3} parent=11 // pred_fallthru
        _
    $region12: #{recommendation_gat_forward.3} parent=5 // pred_fallthru
      _
    %p201 = scmp.lt.s32.totalorder %s12, 2
    // Predicated region
    $region29: #{recommendation_gat_forward.3} parent=5 // pred_check
      %p202 = pneg %p201
    $region30: #{recommendation_gat_forward.3} parent=5 // pred_check_branch
      %204 = sbr.rel (%p202) target = $region32
    $region31: #{recommendation_gat_forward.3} parent=5 // pred_region
      // Predicated region
      $region33: #{recommendation_gat_forward.3} parent=31 // pred_check
        %p205 = pneg %p53
      $region34: #{recommendation_gat_forward.3} parent=31 // pred_check_branch
        %207 = sbr.rel (%p205) target = $region36
      $region35: #{recommendation_gat_forward.3} parent=31 // pred_region
        %s208 = smul.u32 4, %s12
        %p209 = scmp.lt.s32.totalorder %s208, 7
        %s210 = scalar_select %p209, %s208, 7
        %s211 = smul.addr %s210, 8
        %s212 = scalar_lea.vmem %s1, %s211
        %s213 = smul.u32 4, %s12
      $region36: #{recommendation_gat_forward.3} parent=31 // pred_fallthru
        _
      // Predicated region
      $region37: #{recommendation_gat_forward.3} parent=31 // pred_check
        %p214 = pneg %p79
      $region38: #{recommendation_gat_forward.3} parent=31 // pred_check_branch
        %216 = sbr.rel (%p214) target = $region40
      $region39: #{recommendation_gat_forward.3} parent=31 // pred_region
        %s217 = smul.u32 4, %s12
        %p218 = scmp.lt.s32.totalorder %s217, 7
        %s219 = scalar_select %p218, %s217, 7
        %s220 = smul.addr %s219, 4
        %s221 = scalar_lea.vmem %s2, %s220
        %s222 = smul.u32 4, %s12
      $region40: #{recommendation_gat_forward.3} parent=31 // pred_fallthru
        _
    $region32: #{recommendation_gat_forward.3} parent=5 // pred_fallthru
      _
    %p223 = scmp.le.s32.totalorder 1, %s12
    %p224 = scmp.lt.s32.totalorder %s12, 3
    %p225 = pnand %p223, %p224
    %p226 = pneg %p225
    // Predicated region
    $region41: #{recommendation_gat_forward.3} parent=5 // pred_check
      _
    $region42: #{recommendation_gat_forward.3} parent=5 // pred_check_branch
      %228 = sbr.rel (%p225) target = $region44
    $region43: #{recommendation_gat_forward.3} parent=5 // pred_region
      %s229 = ssub.s32 %s12, 1
      %p230 = pneg %p33
      %p231 = pneg %p30
      %s232 = smul.u32 4, %s17
      %p233 = scmp.lt.s32.totalorder %s232, 7
      %s234 = scalar_select %p233, %s232, 7
      %s235 = smul.addr %s234, 8
      %s236 = scalar_lea.vmem %s1, %s235
      %p237 = pneg %p59
      %p238 = pneg %p56
      %s239 = smul.u32 4, %s17
      %p240 = scmp.lt.s32.totalorder %s239, 7
      %s241 = scalar_select %p240, %s239, 7
      %s242 = smul.addr %s241, 4
      %s243 = scalar_lea.vmem %s2, %s242
      %p244 = pneg %p85
      %p245 = pneg %p82
      %p246 = pneg %p106
      %p247 = pneg %p103
      %p248 = pneg %p127
      %p249 = pneg %p124
      %p250 = pneg %p148
      %p251 = pneg %p145
      %p252 = pneg %p174
      %p253 = pneg %p171
      %s254 = smul.u32 4, %s17
      %p255 = scmp.lt.s32.totalorder %s254, 7
      %s256 = scalar_select %p255, %s254, 7
      %s257 = smul.addr %s256, 8
      %s258 = scalar_lea.vmem %s6, %s257
      %s259 = smul.u32 4, %s17
      %p260 = scmp.lt.s32.totalorder %s259, 7
      %s261 = scalar_select %p260, %s259, 7
      %s262 = smul.addr %s261, 8
      %s263 = scalar_lea.vmem %s1, %s262
      %s264 = smul.u32 4, %s17
      %s265 = smul.u32 4, %s17
      %p266 = scmp.lt.s32.totalorder %s265, 7
      %s267 = scalar_select %p266, %s265, 7
      %s268 = smul.addr %s267, 4
      %s269 = scalar_lea.vmem %s2, %s268
      %s270 = smul.u32 4, %s17
      %s271 = smul.u32 4, %s17
      %p272 = scmp.lt.s32.totalorder %s271, 7
      %s273 = scalar_select %p272, %s271, 7
      %s274 = smul.addr %s273, 8
      %s275 = scalar_lea.vmem %s6, %s274
      %s276 = smul.u32 4, %s17
      %v278 = vld [vmem:[%s0] sm:$0xff]
      %v279 = vld [vmem:[%s0 + $0x8] sm:$0xff]
      %v280 = vld [vmem:[%s0 + $0x10] sm:$0xff]
      %v281 = vld [vmem:[%s0 + $0x18] sm:$0xff]
      %v282 = vld [vmem:[%s0 + $0x20] sm:$0xff]
      %v283 = vld [vmem:[%s0 + $0x28] sm:$0xff]
      %v284 = vld [vmem:[%s0 + $0x30] sm:$0xff]
      %v285 = vld [vmem:[%s0 + $0x38] sm:$0xff]
      %v286 = vpack.c.bf16 %v279, %v278
      %v287 = vpack.c.bf16 %v281, %v280
      %v288 = vpack.c.bf16 %v283, %v282
      %v289 = vpack.c.bf16 %v285, %v284
      %v290 = vld [vmem:[%s263] sm:$0xff]
      %v291 = vld [vmem:[%s263 + $0x8] sm:$0xff]
      %v292 = vld [vmem:[%s263 + $0x10] sm:$0xff]
      %v293 = vld [vmem:[%s263 + $0x18] sm:$0xff]
      %v294 = vpack.c.bf16 %v291, %v290
      %v295 = vpack.c.bf16 %v293, %v292
      %v296 = vld [vmem:[%s3] sm:$0xf]
      %v297 = vld [vmem:[%s3 + $0x4] sm:$0xf]
      %v298 = vld [vmem:[%s3 + $0x8] sm:$0xf]
      %v299 = vld [vmem:[%s3 + $0xc] sm:$0xf]
      %v304 = vunpack.c.l.b16 %v296
      %v305 = vunpack.c.l.b16 %v297
      %v306 = vunpack.c.l.b16 %v298
      %v307 = vunpack.c.l.b16 %v299
      %v308 = vpack.c.b16 %v305, %v304
      %v309 = vpack.c.b16 %v307, %v306
      %vm312 = vcmask 261120
      %v314 = vsel %vm312, %v286, 0
      %v317 = vsel %vm312, %v287, 0
      %v320 = vsel %vm312, %v288, 0
      %v323 = vsel %vm312, %v289, 0
      %325 = vmatpush.bf16.msra.mxu0 0
      %326 = vmatpush.bf16.msra.mxu0 0
      %327 = vmatpush.bf16.msra.mxu0 0
      %328 = vmatpush.bf16.msra.mxu0 0
      %329 = vmatpush.bf16.msra.mxu0 0
      %330 = vmatpush.bf16.msra.mxu0 0
      %331 = vmatpush.bf16.msra.mxu0 %v309
      %332 = vmatpush.bf16.msra.mxu0 %v308
      %333 = vmatmul.bf16.gmra.mxu0 %v314
      %v334 = vpop.f32.mrf.mxu0
      %v335 = vadd.f32 0.0, %v334
      %v336 = vpop.f32.mrf.mxu0
      %v337 = vadd.f32 0.0, %v336
      %338 = vmatmul.bf16.gmra.mxu0 %v317
      %v339 = vpop.f32.mrf.mxu0
      %v340 = vadd.f32 0.0, %v339
      %v341 = vpop.f32.mrf.mxu0
      %v342 = vadd.f32 0.0, %v341
      %343 = vmatmul.bf16.gmra.mxu0 %v320
      %v344 = vpop.f32.mrf.mxu0
      %v345 = vadd.f32 0.0, %v344
      %v346 = vpop.f32.mrf.mxu0
      %v347 = vadd.f32 0.0, %v346
      %348 = vmatmul.bf16.gmra.mxu0 %v323
      %v349 = vpop.f32.mrf.mxu0
      %v350 = vadd.f32 0.0, %v349
      %v351 = vpop.f32.mrf.mxu0
      %v352 = vadd.f32 0.0, %v351
      %353 = vdwg.mxu0
      %v354 = vld [vmem:[%s4] sm:$0xf]
      %v355 = vld [vmem:[%s4 + $0x4] sm:$0xf]
      %v356 = vld [vmem:[%s4 + $0x8] sm:$0xf]
      %v357 = vld [vmem:[%s4 + $0xc] sm:$0xf]
      %v362 = vunpack.c.l.b16 %v354
      %v363 = vunpack.c.l.b16 %v355
      %v364 = vunpack.c.l.b16 %v356
      %v365 = vunpack.c.l.b16 %v357
      %v366 = vpack.c.b16 %v363, %v362
      %v367 = vpack.c.b16 %v365, %v364
      %370 = vmatpush.bf16.msra.mxu0 0
      %371 = vmatpush.bf16.msra.mxu0 0
      %372 = vmatpush.bf16.msra.mxu0 0
      %373 = vmatpush.bf16.msra.mxu0 0
      %374 = vmatpush.bf16.msra.mxu0 0
      %375 = vmatpush.bf16.msra.mxu0 0
      %376 = vmatpush.bf16.msra.mxu0 %v367
      %377 = vmatpush.bf16.msra.mxu0 %v366
      %378 = vmatmul.bf16.gmra.mxu0 %v314
      %v379 = vpop.f32.mrf.mxu0
      %v380 = vadd.f32 0.0, %v379
      %v381 = vpop.f32.mrf.mxu0
      %v382 = vadd.f32 0.0, %v381
      %383 = vmatmul.bf16.gmra.mxu0 %v317
      %v384 = vpop.f32.mrf.mxu0
      %v385 = vadd.f32 0.0, %v384
      %v386 = vpop.f32.mrf.mxu0
      %v387 = vadd.f32 0.0, %v386
      %388 = vmatmul.bf16.gmra.mxu0 %v320
      %v389 = vpop.f32.mrf.mxu0
      %v390 = vadd.f32 0.0, %v389
      %v391 = vpop.f32.mrf.mxu0
      %v392 = vadd.f32 0.0, %v391
      %393 = vmatmul.bf16.gmra.mxu0 %v323
      %v394 = vpop.f32.mrf.mxu0
      %v395 = vadd.f32 0.0, %v394
      %v396 = vpop.f32.mrf.mxu0
      %v397 = vadd.f32 0.0, %v396
      %398 = vdwg.mxu0
      %v400 = vsel %vm312, %v294, 0
      %v403 = vsel %vm312, %v295, 0
      %405 = vmatpush.bf16.msra.mxu0 0
      %406 = vmatpush.bf16.msra.mxu0 0
      %407 = vmatpush.bf16.msra.mxu0 0
      %408 = vmatpush.bf16.msra.mxu0 0
      %409 = vmatpush.bf16.msra.mxu0 0
      %410 = vmatpush.bf16.msra.mxu0 0
      %411 = vmatpush.bf16.msra.mxu0 %v367
      %412 = vmatpush.bf16.msra.mxu0 %v366
      %413 = vmatmul.bf16.gmra.mxu0 %v400
      %v414 = vpop.f32.mrf.mxu0
      %v415 = vadd.f32 0.0, %v414
      %v416 = vpop.f32.mrf.mxu0
      %v417 = vadd.f32 0.0, %v416
      %418 = vmatmul.bf16.gmra.mxu0 %v403
      %v419 = vpop.f32.mrf.mxu0
      %v420 = vadd.f32 0.0, %v419
      %v421 = vpop.f32.mrf.mxu0
      %v422 = vadd.f32 0.0, %v421
      %423 = vdwg.mxu0
      %424 = vxpose.xlu0.b32.start [1/16] %v380, 128
      %425 = vxpose.xlu0.b32.cont [2/16] %v382, 128
      %426 = vxpose.xlu0.b32.cont [3/16] %v385, 128
      %427 = vxpose.xlu0.b32.cont [4/16] %v387, 128
      %428 = vxpose.xlu0.b32.cont [5/16] %v390, 128
      %429 = vxpose.xlu0.b32.cont [6/16] %v392, 128
      %430 = vxpose.xlu0.b32.cont [7/16] %v395, 128
      %431 = vxpose.xlu0.b32.cont [8/16] %v397, 128
      %432 = vxpose.xlu0.b32.cont [9/16] 0.0, 128
      %433 = vxpose.xlu0.b32.cont [10/16] 0.0, 128
      %434 = vxpose.xlu0.b32.cont [11/16] 0.0, 128
      %435 = vxpose.xlu0.b32.cont [12/16] 0.0, 128
      %436 = vxpose.xlu0.b32.cont [13/16] 0.0, 128
      %437 = vxpose.xlu0.b32.cont [14/16] 0.0, 128
      %438 = vxpose.xlu0.b32.cont [15/16] 0.0, 128
      %439 = vxpose.xlu0.b32.end [16/16] 0.0, 128
      %v440 = vpop.trf.xlu0
      %v441 = vpop.trf.xlu0
      %v442 = vpop.trf.xlu0
      %v443 = vpop.trf.xlu0
      %v444 = vpop.trf.xlu0
      %v445 = vpop.trf.xlu0
      %v446 = vpop.trf.xlu0
      %v447 = vpop.trf.xlu0
      %v448 = vpop.trf.xlu0
      %v449 = vpop.trf.xlu0
      %v450 = vpop.trf.xlu0
      %v451 = vpop.trf.xlu0
      %v452 = vpop.trf.xlu0
      %v453 = vpop.trf.xlu0
      %v454 = vpop.trf.xlu0
      %v455 = vpop.trf.xlu0
      %457 = vset.pattern.permute.xlu0 1
      %458 = vperm.xlu0 %457, %v415
      %v459 = vpop.permute.xlu0 %458
      %462 = vset.pattern.permute.xlu0 1
      %463 = vperm.xlu0 %462, %v417
      %v464 = vpop.permute.xlu0 %463
      %467 = vset.pattern.permute.xlu0 1
      %468 = vperm.xlu0 %467, %v420
      %v469 = vpop.permute.xlu0 %468
      %472 = vset.pattern.permute.xlu0 1
      %473 = vperm.xlu0 %472, %v422
      %v474 = vpop.permute.xlu0 %473
      %v476 = vperm.slane %v440, 0
      %v477 = vadd.f32 %v459, %v476
      %v478 = vadd.f32 %v464, %v476
      %v479 = vadd.f32 %v469, %v476
      %v480 = vadd.f32 %v474, %v476
      %vm481 = vcmp.gt.f32.partialorder %v477, 0.0
      %vm482 = vcmp.gt.f32.partialorder %v478, 0.0
      %vm483 = vcmp.gt.f32.partialorder %v479, 0.0
      %vm484 = vcmp.gt.f32.partialorder %v480, 0.0
      %v485 = vmul.f32 %v477, 0.2
      %v486 = vmul.f32 %v478, 0.2
      %v487 = vmul.f32 %v479, 0.2
      %v488 = vmul.f32 %v480, 0.2
      %v489 = vsel %vm481, %v477, %v485
      %v490 = vsel %vm482, %v478, %v486
      %v491 = vsel %vm483, %v479, %v487
      %v492 = vsel %vm484, %v480, %v488
      %v493 = vld [vmem:[%s269] sm:$0xf]
      %v494 = vld [vmem:[%s269 + $0x4] sm:$0xf]
      %v495 = vld [vmem:[%s269 + $0x8] sm:$0xf]
      %v496 = vld [vmem:[%s269 + $0xc] sm:$0xf]
      %v497 = vunpack.c.l.bf16 %v493
      %v498 = vunpack.c.l.bf16 %v494
      %v499 = vunpack.c.l.bf16 %v495
      %v500 = vunpack.c.l.bf16 %v496
      %vm501 = vcmask 523264
      %v502 = vsel %vm501, %v489, -inf
      %503 = vmax.xlane.f32.xlu0 %v502
      %v504 = vpop.xlane.xlu0 %503
      %v505 = vsel %vm501, %v490, -inf
      %506 = vmax.xlane.f32.xlu0 %v505
      %v507 = vpop.xlane.xlu0 %506
      %v508 = vsel %vm501, %v491, -inf
      %509 = vmax.xlane.f32.xlu0 %v508
      %v510 = vpop.xlane.xlu0 %509
      %v511 = vsel %vm501, %v492, -inf
      %512 = vmax.xlane.f32.xlu0 %v511
      %v513 = vpop.xlane.xlu0 %512
      %v514 = vsub.f32 %v489, %v504
      %v515 = vsub.f32 %v490, %v507
      %v516 = vsub.f32 %v491, %v510
      %v517 = vsub.f32 %v492, %v513
      %v518 = vmul.f32 %v514, 1.442695
      %v519 = vpow.pop %v518
      %v520 = vmul.f32 %v515, 1.442695
      %v521 = vpow.pop %v520
      %v522 = vmul.f32 %v516, 1.442695
      %v523 = vpow.pop %v522
      %v524 = vmul.f32 %v517, 1.442695
      %v525 = vpow.pop %v524
      %v526 = vmul.f32 %v519, %v497
      %v527 = vmul.f32 %v521, %v498
      %v528 = vmul.f32 %v523, %v499
      %v529 = vmul.f32 %v525, %v500
      %v530 = vsel %vm501, %v526, 0.0
      %531 = vadd.xlane.f32.xlu0 %v530
      %v532 = vpop.xlane.xlu0 %531
      %v533 = vsel %vm501, %v527, 0.0
      %534 = vadd.xlane.f32.xlu0 %v533
      %v535 = vpop.xlane.xlu0 %534
      %v536 = vsel %vm501, %v528, 0.0
      %537 = vadd.xlane.f32.xlu0 %v536
      %v538 = vpop.xlane.xlu0 %537
      %v539 = vsel %vm501, %v529, 0.0
      %540 = vadd.xlane.f32.xlu0 %v539
      %v541 = vpop.xlane.xlu0 %540
      %v542 = vrcp.pop %v532
      %v543 = vrcp.pop %v535
      %v544 = vrcp.pop %v538
      %v545 = vrcp.pop %v541
      %v546 = vmul.f32 %v526, %v542
      %v547 = vmul.f32 %v527, %v543
      %v548 = vmul.f32 %v528, %v544
      %v549 = vmul.f32 %v529, %v545
      %v550 = vpack.c.bf16 %v547, %v546
      %v551 = vpack.c.bf16 %v549, %v548
      %v552 = vpack.c.bf16 %v337, %v335
      %v553 = vpack.c.bf16 %v342, %v340
      %v554 = vpack.c.bf16 %v347, %v345
      %v555 = vpack.c.bf16 %v352, %v350
      %v556 = vld [vmem:[%s5] sm:$0x1]
      %v558 = vperm.slane %v556, 0
      %v561 = vsel %vm501, %v550, 0
      %v564 = vsel %vm501, %v551, 0
      %566 = vmatpush.bf16.msra.mxu0 0
      %567 = vmatpush.bf16.msra.mxu0 0
      %568 = vmatpush.bf16.msra.mxu0 0
      %569 = vmatpush.bf16.msra.mxu0 0
      %570 = vmatpush.bf16.msra.mxu0 %v555
      %571 = vmatpush.bf16.msra.mxu0 %v554
      %572 = vmatpush.bf16.msra.mxu0 %v553
      %573 = vmatpush.bf16.msra.mxu0 %v552
      %574 = vmatmul.bf16.gmra.mxu0 %v561
      %v575 = vpop.f32.mrf.mxu0
      %v576 = vadd.f32 %v558, %v575
      %v577 = vpop.f32.mrf.mxu0
      %v578 = vadd.f32 %v558, %v577
      %579 = vmatmul.bf16.gmra.mxu0 %v564
      %v580 = vpop.f32.mrf.mxu0
      %v581 = vadd.f32 %v558, %v580
      %v582 = vpop.f32.mrf.mxu0
      %v583 = vadd.f32 %v558, %v582
      %584 = vdwg.mxu0
      %585 = vst [vmem:[%s275] sm:$0xff] %v576
      %586 = vst [vmem:[%s275 + $0x8] sm:$0xff] %v578
      %587 = vst [vmem:[%s275 + $0x10] sm:$0xff] %v581
      %588 = vst [vmem:[%s275 + $0x18] sm:$0xff] %v583
      %s589 = smul.u32 4, %s17
      %p590 = scmp.lt.s32.totalorder %s589, 7
      %s591 = scalar_select %p590, %s589, 7
      %s592 = smul.addr %s591, 8
      %s593 = scalar_lea.vmem %s6, %s592
      // Predicated region
      $region45: #{recommendation_gat_forward.3} parent=43 // pred_check
        %p594 = pneg %p171
      $region46: #{recommendation_gat_forward.3} parent=43 // pred_check_branch
        %596 = sbr.rel (%p594) target = $region48
      $region47: #{recommendation_gat_forward.3} parent=43 // pred_region
        %s597 = smul.u32 4, %s17
      $region48: #{recommendation_gat_forward.3} parent=43 // pred_fallthru
        _
    $region44: #{recommendation_gat_forward.3} parent=5 // pred_fallthru
      _
    %p598 = scmp.le.s32.totalorder 2, %s12
    // Predicated region
    $region49: #{recommendation_gat_forward.3} parent=5 // pred_check
      %p599 = pneg %p598
    $region50: #{recommendation_gat_forward.3} parent=5 // pred_check_branch
      %601 = sbr.rel (%p599) target = $region52
    $region51: #{recommendation_gat_forward.3} parent=5 // pred_region
      %s602 = ssub.s32 %s12, 2
      // Predicated region
      $region53: #{recommendation_gat_forward.3} parent=51 // pred_check
        %p603 = pneg %p177
      $region54: #{recommendation_gat_forward.3} parent=51 // pred_check_branch
        %605 = sbr.rel (%p603) target = $region56
      $region55: #{recommendation_gat_forward.3} parent=51 // pred_region
        %s606 = smul.u32 4, %s18
        %p607 = scmp.lt.s32.totalorder %s606, 7
        %s608 = scalar_select %p607, %s606, 7
        %s609 = smul.addr %s608, 8
        %s610 = scalar_lea.vmem %s6, %s609
      $region56: #{recommendation_gat_forward.3} parent=51 // pred_fallthru
        _
    $region52: #{recommendation_gat_forward.3} parent=5 // pred_fallthru
      _
  $region6: #{recommendation_gat_forward.3} parent=0 // loop_footer
    %s16 = sadd.s32 1, %s12
  $region7: #{recommendation_gat_forward.3} parent=0 // loop_footer_branch
    %11 = sbr.rel target = $region3
  $region8: #{recommendation_gat_forward.3} parent=0 // loop_exit
    _

// kernel: recommendation_gat_forward.2
$region0: #{recommendation_gat_forward.2}
  #allocation0 [shape = 'u32[]', space=smem, size = 0x4, offset = 0x4, fixed_abs, tag = 'smem constant byte address 0x4 - core index']
  #allocation1 [shape = 'u32[72,128]{1,0:T(1,128)}', space=vmem, size = 0x9000, scoped, tag = 'internal scratch']
  %s0 = inlined_call_operand.vmem [shape: f32[64,16], index: 0, kind: input, shape index: {}, may-alias: {0,1}]
  %s1 = inlined_call_operand.vmem [shape: f32[64,16], index: 1, kind: input, shape index: {}, may-alias: {0,1}]
  %s2 = inlined_call_operand.vmem [shape: bf16[64,64], index: 2, kind: input, shape index: {}]
  %s3 = inlined_call_operand.vmem [shape: bf16[16,32], index: 3, kind: input, shape index: {}]
  %s4 = inlined_call_operand.vmem [shape: bf16[16,8], index: 4, kind: input, shape index: {}]
  %s5 = inlined_call_operand.vmem [shape: f32[1,32], index: 5, kind: input, shape index: {}]
  %s6 = inlined_call_operand.vmem [shape: f32[64,32], index: 6, kind: output, shape index: {}]
  %s7 = sld [smem:[#allocation0]]
  $region57: #{recommendation_gat_forward.2} parent=0
    _
  %s9 = ssub.s32 1, %s7
  %s10 = scalar_select 0, %s9, %s7
  loop: start=0, step=1, limit=4
  $region2: #{recommendation_gat_forward.2} parent=0 // loop_pre_header
    _
  $region3: #{recommendation_gat_forward.2} parent=0 // loop_header
    %s12 = sphi 0, %s16
    %p13 = scmp.ge.s32.totalorder %s12, 4
    %s20 = sphi 0, %s20
    %s22 = sphi 0, %s20
    %s23 = sphi 0, %s22
    %s37 = sphi 0, %s23
    %s43 = sphi 0, %s45
    %s46 = sphi 0, %s43
    %s47 = sphi 0, %s46
    %s63 = sphi 0, %s47
    %s69 = sphi 0, %s71
    %s72 = sphi 0, %s69
    %s73 = sphi 0, %s72
    %s89 = sphi 0, %s73
    %s93 = sphi 0, %s93
    %s95 = sphi 0, %s93
    %s96 = sphi 0, %s95
    %s110 = sphi 0, %s96
    %s114 = sphi 0, %s114
    %s116 = sphi 0, %s114
    %s117 = sphi 0, %s116
    %s131 = sphi 0, %s117
    %s135 = sphi 0, %s135
    %s137 = sphi 0, %s135
    %s138 = sphi 0, %s137
    %s152 = sphi 0, %s138
    %s158 = sphi 0, %s160
    %s161 = sphi 0, %s158
    %s162 = sphi 0, %s161
    %s178 = sphi 0, %s162
  $region4: #{recommendation_gat_forward.2} parent=0 // loop_header_branch
    %15 = sbr.rel (%p13) target = $region8
  $region5: #{recommendation_gat_forward.2} parent=0 // loop_body
    %s17 = ssub.s32 %s12, 1
    %s18 = ssub.s32 %s12, 2
    %s19 = sadd.s32 %s12, 1
    %s21 = sadd.s32 %s20, 1
    %p24 = scmp.eq.s32.totalorder %s12, 1
    %p25 = scmp.ne.s32.totalorder %s20, %s22
    %p26 = scmp.eq.s32.totalorder %s12, 0
    %p27 = por %p25, %p26
    %p28 = scmp.ne.s32.totalorder %s20, %s22
    %p29 = scmp.eq.s32.totalorder %s17, 1
    %p30 = por %p28, %p29
    %p31 = scmp.ne.s32.totalorder %s22, %s23
    %p32 = scmp.eq.s32.totalorder %s17, 0
    %p33 = por %p31, %p32
    %p34 = scmp.ne.s32.totalorder %s22, %s23
    %p35 = scmp.eq.s32.totalorder %s18, 1
    %p36 = por %p34, %p35
    %p38 = scmp.ne.s32.totalorder %s23, %s37
    %p39 = scmp.eq.s32.totalorder %s18, 0
    %p40 = por %p38, %p39
    %s41 = ssub.s32 %s12, %s19
    %p42 = scmp.eq.s32.totalorder %s41, 0
    %s44 = sadd.s32 %s43, 1
    %s45 = scalar_select %p42, %s43, %s44
    %p48 = pneg %p42
    %p49 = scmp.eq.s32.totalorder %s12, 1
    %p50 = por %p48, %p49
    %p51 = scmp.ne.s32.totalorder %s43, %s46
    %p52 = scmp.eq.s32.totalorder %s12, 0
    %p53 = por %p51, %p52
    %p54 = scmp.ne.s32.totalorder %s43, %s46
    %p55 = scmp.eq.s32.totalorder %s17, 1
    %p56 = por %p54, %p55
    %p57 = scmp.ne.s32.totalorder %s46, %s47
    %p58 = scmp.eq.s32.totalorder %s17, 0
    %p59 = por %p57, %p58
    %p60 = scmp.ne.s32.totalorder %s46, %s47
    %p61 = scmp.eq.s32.totalorder %s18, 1
    %p62 = por %p60, %p61
    %p64 = scmp.ne.s32.totalorder %s47, %s63
    %p65 = scmp.eq.s32.totalorder %s18, 0
    %p66 = por %p64, %p65
    %s67 = ssub.s32 %s12, %s19
    %p68 = scmp.eq.s32.totalorder %s67, 0
    %s70 = sadd.s32 %s69, 1
    %s71 = scalar_select %p68, %s69, %s70
    %p74 = pneg %p68
    %p75 = scmp.eq.s32.totalorder %s12, 1
    %p76 = por %p74, %p75
    %p77 = scmp.ne.s32.totalorder %s69, %s72
    %p78 = scmp.eq.s32.totalorder %s12, 0
    %p79 = por %p77, %p78
    %p80 = scmp.ne.s32.totalorder %s69, %s72
    %p81 = scmp.eq.s32.totalorder %s17, 1
    %p82 = por %p80, %p81
    %p83 = scmp.ne.s32.totalorder %s72, %s73
    %p84 = scmp.eq.s32.totalorder %s17, 0
    %p85 = por %p83, %p84
    %p86 = scmp.ne.s32.totalorder %s72, %s73
    %p87 = scmp.eq.s32.totalorder %s18, 1
    %p88 = por %p86, %p87
    %p90 = scmp.ne.s32.totalorder %s73, %s89
    %p91 = scmp.eq.s32.totalorder %s18, 0
    %p92 = por %p90, %p91
    %s94 = sadd.s32 %s93, 1
    %p97 = scmp.eq.s32.totalorder %s12, 1
    %p98 = scmp.ne.s32.totalorder %s93, %s95
    %p99 = scmp.eq.s32.totalorder %s12, 0
    %p100 = por %p98, %p99
    %p101 = scmp.ne.s32.totalorder %s93, %s95
    %p102 = scmp.eq.s32.totalorder %s17, 1
    %p103 = por %p101, %p102
    %p104 = scmp.ne.s32.totalorder %s95, %s96
    %p105 = scmp.eq.s32.totalorder %s17, 0
    %p106 = por %p104, %p105
    %p107 = scmp.ne.s32.totalorder %s95, %s96
    %p108 = scmp.eq.s32.totalorder %s18, 1
    %p109 = por %p107, %p108
    %p111 = scmp.ne.s32.totalorder %s96, %s110
    %p112 = scmp.eq.s32.totalorder %s18, 0
    %p113 = por %p111, %p112
    %s115 = sadd.s32 %s114, 1
    %p118 = scmp.eq.s32.totalorder %s12, 1
    %p119 = scmp.ne.s32.totalorder %s114, %s116
    %p120 = scmp.eq.s32.totalorder %s12, 0
    %p121 = por %p119, %p120
    %p122 = scmp.ne.s32.totalorder %s114, %s116
    %p123 = scmp.eq.s32.totalorder %s17, 1
    %p124 = por %p122, %p123
    %p125 = scmp.ne.s32.totalorder %s116, %s117
    %p126 = scmp.eq.s32.totalorder %s17, 0
    %p127 = por %p125, %p126
    %p128 = scmp.ne.s32.totalorder %s116, %s117
    %p129 = scmp.eq.s32.totalorder %s18, 1
    %p130 = por %p128, %p129
    %p132 = scmp.ne.s32.totalorder %s117, %s131
    %p133 = scmp.eq.s32.totalorder %s18, 0
    %p134 = por %p132, %p133
    %s136 = sadd.s32 %s135, 1
    %p139 = scmp.eq.s32.totalorder %s12, 1
    %p140 = scmp.ne.s32.totalorder %s135, %s137
    %p141 = scmp.eq.s32.totalorder %s12, 0
    %p142 = por %p140, %p141
    %p143 = scmp.ne.s32.totalorder %s135, %s137
    %p144 = scmp.eq.s32.totalorder %s17, 1
    %p145 = por %p143, %p144
    %p146 = scmp.ne.s32.totalorder %s137, %s138
    %p147 = scmp.eq.s32.totalorder %s17, 0
    %p148 = por %p146, %p147
    %p149 = scmp.ne.s32.totalorder %s137, %s138
    %p150 = scmp.eq.s32.totalorder %s18, 1
    %p151 = por %p149, %p150
    %p153 = scmp.ne.s32.totalorder %s138, %s152
    %p154 = scmp.eq.s32.totalorder %s18, 0
    %p155 = por %p153, %p154
    %s156 = ssub.s32 %s12, %s19
    %p157 = scmp.eq.s32.totalorder %s156, 0
    %s159 = sadd.s32 %s158, 1
    %s160 = scalar_select %p157, %s158, %s159
    %p163 = pneg %p157
    %p164 = scmp.eq.s32.totalorder %s12, 1
    %p165 = por %p163, %p164
    %p166 = scmp.ne.s32.totalorder %s158, %s161
    %p167 = scmp.eq.s32.totalorder %s12, 0
    %p168 = por %p166, %p167
    %p169 = scmp.ne.s32.totalorder %s158, %s161
    %p170 = scmp.eq.s32.totalorder %s17, 1
    %p171 = por %p169, %p170
    %p172 = scmp.ne.s32.totalorder %s161, %s162
    %p173 = scmp.eq.s32.totalorder %s17, 0
    %p174 = por %p172, %p173
    %p175 = scmp.ne.s32.totalorder %s161, %s162
    %p176 = scmp.eq.s32.totalorder %s18, 1
    %p177 = por %p175, %p176
    %p179 = scmp.ne.s32.totalorder %s162, %s178
    %p180 = scmp.eq.s32.totalorder %s18, 0
    %p181 = por %p179, %p180
    %p182 = scmp.le.s32.totalorder 1, %s12
    %p183 = scmp.lt.s32.totalorder %s12, 3
    %p184 = pnand %p182, %p183
    %p185 = pneg %p184
    // Predicated region
    $region9: #{recommendation_gat_forward.2} parent=5 // pred_check
      _
    $region10: #{recommendation_gat_forward.2} parent=5 // pred_check_branch
      %187 = sbr.rel (%p184) target = $region12
    $region11: #{recommendation_gat_forward.2} parent=5 // pred_region
      %s188 = ssub.s32 %s12, 1
      // Predicated region
      $region13: #{recommendation_gat_forward.2} parent=11 // pred_check
        %p189 = pneg %p33
      $region14: #{recommendation_gat_forward.2} parent=11 // pred_check_branch
        %191 = sbr.rel (%p189) target = $region16
      $region15: #{recommendation_gat_forward.2} parent=11 // pred_region
        _
      $region16: #{recommendation_gat_forward.2} parent=11 // pred_fallthru
        _
      // Predicated region
      $region17: #{recommendation_gat_forward.2} parent=11 // pred_check
        %p192 = pneg %p106
      $region18: #{recommendation_gat_forward.2} parent=11 // pred_check_branch
        %194 = sbr.rel (%p192) target = $region20
      $region19: #{recommendation_gat_forward.2} parent=11 // pred_region
        _
      $region20: #{recommendation_gat_forward.2} parent=11 // pred_fallthru
        _
      // Predicated region
      $region21: #{recommendation_gat_forward.2} parent=11 // pred_check
        %p195 = pneg %p127
      $region22: #{recommendation_gat_forward.2} parent=11 // pred_check_branch
        %197 = sbr.rel (%p195) target = $region24
      $region23: #{recommendation_gat_forward.2} parent=11 // pred_region
        _
      $region24: #{recommendation_gat_forward.2} parent=11 // pred_fallthru
        _
      // Predicated region
      $region25: #{recommendation_gat_forward.2} parent=11 // pred_check
        %p198 = pneg %p148
      $region26: #{recommendation_gat_forward.2} parent=11 // pred_check_branch
        %200 = sbr.rel (%p198) target = $region28
      $region27: #{recommendation_gat_forward.2} parent=11 // pred_region
        _
      $region28: #{recommendation_gat_forward.2} parent=11 // pred_fallthru
        _
    $region12: #{recommendation_gat_forward.2} parent=5 // pred_fallthru
      _
    %p201 = scmp.lt.s32.totalorder %s12, 2
    // Predicated region
    $region29: #{recommendation_gat_forward.2} parent=5 // pred_check
      %p202 = pneg %p201
    $region30: #{recommendation_gat_forward.2} parent=5 // pred_check_branch
      %204 = sbr.rel (%p202) target = $region32
    $region31: #{recommendation_gat_forward.2} parent=5 // pred_region
      // Predicated region
      $region33: #{recommendation_gat_forward.2} parent=31 // pred_check
        %p205 = pneg %p53
      $region34: #{recommendation_gat_forward.2} parent=31 // pred_check_branch
        %207 = sbr.rel (%p205) target = $region36
      $region35: #{recommendation_gat_forward.2} parent=31 // pred_region
        %s208 = smul.u32 4, %s12
        %p209 = scmp.lt.s32.totalorder %s208, 7
        %s210 = scalar_select %p209, %s208, 7
        %s211 = smul.addr %s210, 8
        %s212 = scalar_lea.vmem %s1, %s211
        %s213 = smul.u32 4, %s12
      $region36: #{recommendation_gat_forward.2} parent=31 // pred_fallthru
        _
      // Predicated region
      $region37: #{recommendation_gat_forward.2} parent=31 // pred_check
        %p214 = pneg %p79
      $region38: #{recommendation_gat_forward.2} parent=31 // pred_check_branch
        %216 = sbr.rel (%p214) target = $region40
      $region39: #{recommendation_gat_forward.2} parent=31 // pred_region
        %s217 = smul.u32 4, %s12
        %p218 = scmp.lt.s32.totalorder %s217, 7
        %s219 = scalar_select %p218, %s217, 7
        %s220 = smul.addr %s219, 4
        %s221 = scalar_lea.vmem %s2, %s220
        %s222 = smul.u32 4, %s12
      $region40: #{recommendation_gat_forward.2} parent=31 // pred_fallthru
        _
    $region32: #{recommendation_gat_forward.2} parent=5 // pred_fallthru
      _
    %p223 = scmp.le.s32.totalorder 1, %s12
    %p224 = scmp.lt.s32.totalorder %s12, 3
    %p225 = pnand %p223, %p224
    %p226 = pneg %p225
    // Predicated region
    $region41: #{recommendation_gat_forward.2} parent=5 // pred_check
      _
    $region42: #{recommendation_gat_forward.2} parent=5 // pred_check_branch
      %228 = sbr.rel (%p225) target = $region44
    $region43: #{recommendation_gat_forward.2} parent=5 // pred_region
      %s229 = ssub.s32 %s12, 1
      %p230 = pneg %p33
      %p231 = pneg %p30
      %s232 = smul.u32 4, %s17
      %p233 = scmp.lt.s32.totalorder %s232, 7
      %s234 = scalar_select %p233, %s232, 7
      %s235 = smul.addr %s234, 8
      %s236 = scalar_lea.vmem %s1, %s235
      %p237 = pneg %p59
      %p238 = pneg %p56
      %s239 = smul.u32 4, %s17
      %p240 = scmp.lt.s32.totalorder %s239, 7
      %s241 = scalar_select %p240, %s239, 7
      %s242 = smul.addr %s241, 4
      %s243 = scalar_lea.vmem %s2, %s242
      %p244 = pneg %p85
      %p245 = pneg %p82
      %p246 = pneg %p106
      %p247 = pneg %p103
      %p248 = pneg %p127
      %p249 = pneg %p124
      %p250 = pneg %p148
      %p251 = pneg %p145
      %p252 = pneg %p174
      %p253 = pneg %p171
      %s254 = smul.u32 4, %s17
      %p255 = scmp.lt.s32.totalorder %s254, 7
      %s256 = scalar_select %p255, %s254, 7
      %s257 = smul.addr %s256, 8
      %s258 = scalar_lea.vmem %s6, %s257
      %s259 = smul.u32 4, %s17
      %p260 = scmp.lt.s32.totalorder %s259, 7
      %s261 = scalar_select %p260, %s259, 7
      %s262 = smul.addr %s261, 8
      %s263 = scalar_lea.vmem %s1, %s262
      %s264 = smul.u32 4, %s17
      %s265 = smul.u32 4, %s17
      %p266 = scmp.lt.s32.totalorder %s265, 7
      %s267 = scalar_select %p266, %s265, 7
      %s268 = smul.addr %s267, 4
      %s269 = scalar_lea.vmem %s2, %s268
      %s270 = smul.u32 4, %s17
      %s271 = smul.u32 4, %s17
      %p272 = scmp.lt.s32.totalorder %s271, 7
      %s273 = scalar_select %p272, %s271, 7
      %s274 = smul.addr %s273, 8
      %s275 = scalar_lea.vmem %s6, %s274
      %s276 = smul.u32 4, %s17
      %v278 = vld [vmem:[%s0] sm:$0xff]
      %v279 = vld [vmem:[%s0 + $0x8] sm:$0xff]
      %v280 = vld [vmem:[%s0 + $0x10] sm:$0xff]
      %v281 = vld [vmem:[%s0 + $0x18] sm:$0xff]
      %v282 = vld [vmem:[%s0 + $0x20] sm:$0xff]
      %v283 = vld [vmem:[%s0 + $0x28] sm:$0xff]
      %v284 = vld [vmem:[%s0 + $0x30] sm:$0xff]
      %v285 = vld [vmem:[%s0 + $0x38] sm:$0xff]
      %v286 = vpack.c.bf16 %v279, %v278
      %v287 = vpack.c.bf16 %v281, %v280
      %v288 = vpack.c.bf16 %v283, %v282
      %v289 = vpack.c.bf16 %v285, %v284
      %v290 = vld [vmem:[%s263] sm:$0xff]
      %v291 = vld [vmem:[%s263 + $0x8] sm:$0xff]
      %v292 = vld [vmem:[%s263 + $0x10] sm:$0xff]
      %v293 = vld [vmem:[%s263 + $0x18] sm:$0xff]
      %v294 = vpack.c.bf16 %v291, %v290
      %v295 = vpack.c.bf16 %v293, %v292
      %v296 = vld [vmem:[%s3] sm:$0xf]
      %v297 = vld [vmem:[%s3 + $0x4] sm:$0xf]
      %v300 = vunpack.c.l.b16 %v296
      %v301 = vunpack.c.l.b16 %v297
      %v302 = vpack.c.b16 %v301, %v300
      %vm304 = vcmask 130048
      %v306 = vsel %vm304, %v286, 0
      %v309 = vsel %vm304, %v287, 0
      %v312 = vsel %vm304, %v288, 0
      %v315 = vsel %vm304, %v289, 0
      %317 = vmatpush.bf16.msra.mxu0 0
      %318 = vmatpush.bf16.msra.mxu0 0
      %319 = vmatpush.bf16.msra.mxu0 0
      %320 = vmatpush.bf16.msra.mxu0 0
      %321 = vmatpush.bf16.msra.mxu0 0
      %322 = vmatpush.bf16.msra.mxu0 0
      %323 = vmatpush.bf16.msra.mxu0 0
      %324 = vmatpush.bf16.msra.mxu0 %v302
      %325 = vmatmul.bf16.gmra.mxu0 %v306
      %v326 = vpop.f32.mrf.mxu0
      %v327 = vadd.f32 0.0, %v326
      %v328 = vpop.f32.mrf.mxu0
      %v329 = vadd.f32 0.0, %v328
      %330 = vmatmul.bf16.gmra.mxu0 %v309
      %v331 = vpop.f32.mrf.mxu0
      %v332 = vadd.f32 0.0, %v331
      %v333 = vpop.f32.mrf.mxu0
      %v334 = vadd.f32 0.0, %v333
      %335 = vmatmul.bf16.gmra.mxu0 %v312
      %v336 = vpop.f32.mrf.mxu0
      %v337 = vadd.f32 0.0, %v336
      %v338 = vpop.f32.mrf.mxu0
      %v339 = vadd.f32 0.0, %v338
      %340 = vmatmul.bf16.gmra.mxu0 %v315
      %v341 = vpop.f32.mrf.mxu0
      %v342 = vadd.f32 0.0, %v341
      %v343 = vpop.f32.mrf.mxu0
      %v344 = vadd.f32 0.0, %v343
      %345 = vdwg.mxu0
      %v346 = vld [vmem:[%s4] sm:$0xf]
      %v347 = vld [vmem:[%s4 + $0x4] sm:$0xf]
      %v350 = vunpack.c.l.b16 %v346
      %v351 = vunpack.c.l.b16 %v347
      %v352 = vpack.c.b16 %v351, %v350
      %354 = vmatpush.bf16.msra.mxu0 0
      %355 = vmatpush.bf16.msra.mxu0 0
      %356 = vmatpush.bf16.msra.mxu0 0
      %357 = vmatpush.bf16.msra.mxu0 0
      %358 = vmatpush.bf16.msra.mxu0 0
      %359 = vmatpush.bf16.msra.mxu0 0
      %360 = vmatpush.bf16.msra.mxu0 0
      %361 = vmatpush.bf16.msra.mxu0 %v352
      %362 = vmatmul.bf16.gmra.mxu0 %v306
      %v363 = vpop.f32.mrf.mxu0
      %v364 = vadd.f32 0.0, %v363
      %v365 = vpop.f32.mrf.mxu0
      %v366 = vadd.f32 0.0, %v365
      %367 = vmatmul.bf16.gmra.mxu0 %v309
      %v368 = vpop.f32.mrf.mxu0
      %v369 = vadd.f32 0.0, %v368
      %v370 = vpop.f32.mrf.mxu0
      %v371 = vadd.f32 0.0, %v370
      %372 = vmatmul.bf16.gmra.mxu0 %v312
      %v373 = vpop.f32.mrf.mxu0
      %v374 = vadd.f32 0.0, %v373
      %v375 = vpop.f32.mrf.mxu0
      %v376 = vadd.f32 0.0, %v375
      %377 = vmatmul.bf16.gmra.mxu0 %v315
      %v378 = vpop.f32.mrf.mxu0
      %v379 = vadd.f32 0.0, %v378
      %v380 = vpop.f32.mrf.mxu0
      %v381 = vadd.f32 0.0, %v380
      %382 = vdwg.mxu0
      %v384 = vsel %vm304, %v294, 0
      %v387 = vsel %vm304, %v295, 0
      %389 = vmatpush.bf16.msra.mxu0 0
      %390 = vmatpush.bf16.msra.mxu0 0
      %391 = vmatpush.bf16.msra.mxu0 0
      %392 = vmatpush.bf16.msra.mxu0 0
      %393 = vmatpush.bf16.msra.mxu0 0
      %394 = vmatpush.bf16.msra.mxu0 0
      %395 = vmatpush.bf16.msra.mxu0 0
      %396 = vmatpush.bf16.msra.mxu0 %v352
      %397 = vmatmul.bf16.gmra.mxu0 %v384
      %v398 = vpop.f32.mrf.mxu0
      %v399 = vadd.f32 0.0, %v398
      %v400 = vpop.f32.mrf.mxu0
      %v401 = vadd.f32 0.0, %v400
      %402 = vmatmul.bf16.gmra.mxu0 %v387
      %v403 = vpop.f32.mrf.mxu0
      %v404 = vadd.f32 0.0, %v403
      %v405 = vpop.f32.mrf.mxu0
      %v406 = vadd.f32 0.0, %v405
      %407 = vdwg.mxu0
      %408 = vxpose.xlu0.b32.start [1/16] %v364, 128
      %409 = vxpose.xlu0.b32.cont [2/16] %v366, 128
      %410 = vxpose.xlu0.b32.cont [3/16] %v369, 128
      %411 = vxpose.xlu0.b32.cont [4/16] %v371, 128
      %412 = vxpose.xlu0.b32.cont [5/16] %v374, 128
      %413 = vxpose.xlu0.b32.cont [6/16] %v376, 128
      %414 = vxpose.xlu0.b32.cont [7/16] %v379, 128
      %415 = vxpose.xlu0.b32.cont [8/16] %v381, 128
      %416 = vxpose.xlu0.b32.cont [9/16] 0.0, 128
      %417 = vxpose.xlu0.b32.cont [10/16] 0.0, 128
      %418 = vxpose.xlu0.b32.cont [11/16] 0.0, 128
      %419 = vxpose.xlu0.b32.cont [12/16] 0.0, 128
      %420 = vxpose.xlu0.b32.cont [13/16] 0.0, 128
      %421 = vxpose.xlu0.b32.cont [14/16] 0.0, 128
      %422 = vxpose.xlu0.b32.cont [15/16] 0.0, 128
      %423 = vxpose.xlu0.b32.end [16/16] 0.0, 128
      %v424 = vpop.trf.xlu0
      %v425 = vpop.trf.xlu0
      %v426 = vpop.trf.xlu0
      %v427 = vpop.trf.xlu0
      %v428 = vpop.trf.xlu0
      %v429 = vpop.trf.xlu0
      %v430 = vpop.trf.xlu0
      %v431 = vpop.trf.xlu0
      %v432 = vpop.trf.xlu0
      %v433 = vpop.trf.xlu0
      %v434 = vpop.trf.xlu0
      %v435 = vpop.trf.xlu0
      %v436 = vpop.trf.xlu0
      %v437 = vpop.trf.xlu0
      %v438 = vpop.trf.xlu0
      %v439 = vpop.trf.xlu0
      %444 = vrot.lane.b32.xlu0 %v399, 124
      %v445 = vpop.permute.xlu0 %444
      %446 = vrot.lane.b32.xlu0 %v401, 124
      %v447 = vpop.permute.xlu0 %446
      %448 = vrot.lane.b32.xlu0 %v404, 124
      %v449 = vpop.permute.xlu0 %448
      %450 = vrot.lane.b32.xlu0 %v406, 124
      %v451 = vpop.permute.xlu0 %450
      %456 = vxpose.xlu0.b32.start [1/16] %v445, 128
      %457 = vxpose.xlu0.b32.cont [2/16] %v447, 128
      %458 = vxpose.xlu0.b32.cont [3/16] %v449, 128
      %459 = vxpose.xlu0.b32.cont [4/16] %v451, 128
      %460 = vxpose.xlu0.b32.cont [5/16] 0.0, 128
      %461 = vxpose.xlu0.b32.cont [6/16] 0.0, 128
      %462 = vxpose.xlu0.b32.cont [7/16] 0.0, 128
      %463 = vxpose.xlu0.b32.cont [8/16] 0.0, 128
      %464 = vxpose.xlu0.b32.cont [9/16] 0.0, 128
      %465 = vxpose.xlu0.b32.cont [10/16] 0.0, 128
      %466 = vxpose.xlu0.b32.cont [11/16] 0.0, 128
      %467 = vxpose.xlu0.b32.cont [12/16] 0.0, 128
      %468 = vxpose.xlu0.b32.cont [13/16] 0.0, 128
      %469 = vxpose.xlu0.b32.cont [14/16] 0.0, 128
      %470 = vxpose.xlu0.b32.cont [15/16] 0.0, 128
      %471 = vxpose.xlu0.b32.end [16/16] 0.0, 128
      %v472 = vpop.trf.xlu0
      %v473 = vpop.trf.xlu0
      %v474 = vpop.trf.xlu0
      %v475 = vpop.trf.xlu0
      %v476 = vpop.trf.xlu0
      %v477 = vpop.trf.xlu0
      %v478 = vpop.trf.xlu0
      %v479 = vpop.trf.xlu0
      %v480 = vpop.trf.xlu0
      %v481 = vpop.trf.xlu0
      %v482 = vpop.trf.xlu0
      %v483 = vpop.trf.xlu0
      %v484 = vpop.trf.xlu0
      %v485 = vpop.trf.xlu0
      %v486 = vpop.trf.xlu0
      %v487 = vpop.trf.xlu0
      %v488 = vperm.slane %v472, 0
      %v489 = vlaneseq
      %v490 = vshrl.u32 %v489, 7
      %492 = vset.pattern.permute.xlu0 %v490
      %493 = vperm.xlu0 %492, %v488
      %v494 = vpop.permute.xlu0 %493
      %v495 = vlaneseq
      %v496 = vshrl.u32 %v495, 7
      %v497 = vadd.s32 %v496, 8
      %498 = vset.pattern.permute.xlu0 %v497
      %499 = vperm.xlu0 %498, %v488
      %v500 = vpop.permute.xlu0 %499
      %v501 = vlaneseq
      %v502 = vshrl.u32 %v501, 7
      %v503 = vadd.s32 %v502, 16
      %504 = vset.pattern.permute.xlu0 %v503
      %505 = vperm.xlu0 %504, %v488
      %v506 = vpop.permute.xlu0 %505
      %v507 = vlaneseq
      %v508 = vshrl.u32 %v507, 7
      %v509 = vadd.s32 %v508, 24
      %510 = vset.pattern.permute.xlu0 %v509
      %511 = vperm.xlu0 %510, %v488
      %v512 = vpop.permute.xlu0 %511
      %v513 = vperm.slane %v472, 1
      %v514 = vlaneseq
      %v515 = vshrl.u32 %v514, 7
      %517 = vset.pattern.permute.xlu0 %v515
      %518 = vperm.xlu0 %517, %v513
      %v519 = vpop.permute.xlu0 %518
      %v520 = vlaneseq
      %v521 = vshrl.u32 %v520, 7
      %v522 = vadd.s32 %v521, 8
      %523 = vset.pattern.permute.xlu0 %v522
      %524 = vperm.xlu0 %523, %v513
      %v525 = vpop.permute.xlu0 %524
      %v526 = vlaneseq
      %v527 = vshrl.u32 %v526, 7
      %v528 = vadd.s32 %v527, 16
      %529 = vset.pattern.permute.xlu0 %v528
      %530 = vperm.xlu0 %529, %v513
      %v531 = vpop.permute.xlu0 %530
      %v532 = vlaneseq
      %v533 = vshrl.u32 %v532, 7
      %v534 = vadd.s32 %v533, 24
      %535 = vset.pattern.permute.xlu0 %v534
      %536 = vperm.xlu0 %535, %v513
      %v537 = vpop.permute.xlu0 %536
      %v538 = vperm.slane %v472, 2
      %v539 = vlaneseq
      %v540 = vshrl.u32 %v539, 7
      %542 = vset.pattern.permute.xlu0 %v540
      %543 = vperm.xlu0 %542, %v538
      %v544 = vpop.permute.xlu0 %543
      %v545 = vlaneseq
      %v546 = vshrl.u32 %v545, 7
      %v547 = vadd.s32 %v546, 8
      %548 = vset.pattern.permute.xlu0 %v547
      %549 = vperm.xlu0 %548, %v538
      %v550 = vpop.permute.xlu0 %549
      %v551 = vlaneseq
      %v552 = vshrl.u32 %v551, 7
      %v553 = vadd.s32 %v552, 16
      %554 = vset.pattern.permute.xlu0 %v553
      %555 = vperm.xlu0 %554, %v538
      %v556 = vpop.permute.xlu0 %555
      %v557 = vlaneseq
      %v558 = vshrl.u32 %v557, 7
      %v559 = vadd.s32 %v558, 24
      %560 = vset.pattern.permute.xlu0 %v559
      %561 = vperm.xlu0 %560, %v538
      %v562 = vpop.permute.xlu0 %561
      %v563 = vperm.slane %v472, 3
      %v564 = vlaneseq
      %v565 = vshrl.u32 %v564, 7
      %567 = vset.pattern.permute.xlu0 %v565
      %568 = vperm.xlu0 %567, %v563
      %v569 = vpop.permute.xlu0 %568
      %v570 = vlaneseq
      %v571 = vshrl.u32 %v570, 7
      %v572 = vadd.s32 %v571, 8
      %573 = vset.pattern.permute.xlu0 %v572
      %574 = vperm.xlu0 %573, %v563
      %v575 = vpop.permute.xlu0 %574
      %v576 = vlaneseq
      %v577 = vshrl.u32 %v576, 7
      %v578 = vadd.s32 %v577, 16
      %579 = vset.pattern.permute.xlu0 %v578
      %580 = vperm.xlu0 %579, %v563
      %v581 = vpop.permute.xlu0 %580
      %v582 = vlaneseq
      %v583 = vshrl.u32 %v582, 7
      %v584 = vadd.s32 %v583, 24
      %585 = vset.pattern.permute.xlu0 %v584
      %586 = vperm.xlu0 %585, %v563
      %v587 = vpop.permute.xlu0 %586
      %v589 = vrot.slane %v424, 1
      %v590 = vrot.slane %v424, 2
      %v591 = vrot.slane %v424, 3
      %v592 = vperm.slane %v424, 0
      %v593 = vperm.slane %v589, 0
      %v594 = vperm.slane %v590, 0
      %v595 = vperm.slane %v591, 0
      %v600 = vadd.f32 %v494, %v592
      %v601 = vadd.f32 %v500, %v592
      %v602 = vadd.f32 %v506, %v592
      %v603 = vadd.f32 %v512, %v592
      %v604 = vadd.f32 %v519, %v593
      %v605 = vadd.f32 %v525, %v593
      %v606 = vadd.f32 %v531, %v593
      %v607 = vadd.f32 %v537, %v593
      %v608 = vadd.f32 %v544, %v594
      %v609 = vadd.f32 %v550, %v594
      %v610 = vadd.f32 %v556, %v594
      %v611 = vadd.f32 %v562, %v594
      %v612 = vadd.f32 %v569, %v595
      %v613 = vadd.f32 %v575, %v595
      %v614 = vadd.f32 %v581, %v595
      %v615 = vadd.f32 %v587, %v595
      %vm616 = vcmp.gt.f32.partialorder %v600, 0.0
      %vm617 = vcmp.gt.f32.partialorder %v601, 0.0
      %vm618 = vcmp.gt.f32.partialorder %v602, 0.0
      %vm619 = vcmp.gt.f32.partialorder %v603, 0.0
      %vm620 = vcmp.gt.f32.partialorder %v604, 0.0
      %vm621 = vcmp.gt.f32.partialorder %v605, 0.0
      %vm622 = vcmp.gt.f32.partialorder %v606, 0.0
      %vm623 = vcmp.gt.f32.partialorder %v607, 0.0
      %vm624 = vcmp.gt.f32.partialorder %v608, 0.0
      %vm625 = vcmp.gt.f32.partialorder %v609, 0.0
      %vm626 = vcmp.gt.f32.partialorder %v610, 0.0
      %vm627 = vcmp.gt.f32.partialorder %v611, 0.0
      %vm628 = vcmp.gt.f32.partialorder %v612, 0.0
      %vm629 = vcmp.gt.f32.partialorder %v613, 0.0
      %vm630 = vcmp.gt.f32.partialorder %v614, 0.0
      %vm631 = vcmp.gt.f32.partialorder %v615, 0.0
      %v632 = vmul.f32 %v600, 0.2
      %v633 = vmul.f32 %v601, 0.2
      %v634 = vmul.f32 %v602, 0.2
      %v635 = vmul.f32 %v603, 0.2
      %v636 = vmul.f32 %v604, 0.2
      %v637 = vmul.f32 %v605, 0.2
      %v638 = vmul.f32 %v606, 0.2
      %v639 = vmul.f32 %v607, 0.2
      %v640 = vmul.f32 %v608, 0.2
      %v641 = vmul.f32 %v609, 0.2
      %v642 = vmul.f32 %v610, 0.2
      %v643 = vmul.f32 %v611, 0.2
      %v644 = vmul.f32 %v612, 0.2
      %v645 = vmul.f32 %v613, 0.2
      %v646 = vmul.f32 %v614, 0.2
      %v647 = vmul.f32 %v615, 0.2
      %v648 = vsel %vm616, %v600, %v632
      %v649 = vsel %vm617, %v601, %v633
      %v650 = vsel %vm618, %v602, %v634
      %v651 = vsel %vm619, %v603, %v635
      %v652 = vsel %vm620, %v604, %v636
      %v653 = vsel %vm621, %v605, %v637
      %v654 = vsel %vm622, %v606, %v638
      %v655 = vsel %vm623, %v607, %v639
      %v656 = vsel %vm624, %v608, %v640
      %v657 = vsel %vm625, %v609, %v641
      %v658 = vsel %vm626, %v610, %v642
      %v659 = vsel %vm627, %v611, %v643
      %v660 = vsel %vm628, %v612, %v644
      %v661 = vsel %vm629, %v613, %v645
      %v662 = vsel %vm630, %v614, %v646
      %v663 = vsel %vm631, %v615, %v647
      %v664 = vld [vmem:[%s269] sm:$0xf]
      %v665 = vld [vmem:[%s269 + $0x4] sm:$0xf]
      %v666 = vld [vmem:[%s269 + $0x8] sm:$0xf]
      %v667 = vld [vmem:[%s269 + $0xc] sm:$0xf]
      %v668 = vunpack.c.l.bf16 %v664
      %v669 = vunpack.c.l.bf16 %v665
      %v670 = vunpack.c.l.bf16 %v666
      %v671 = vunpack.c.l.bf16 %v667
      %vm672 = vcmask 523264
      %v673 = vsel %vm672, %v648, -inf
      %674 = vmax.xlane.f32.xlu0 %v673
      %v675 = vpop.xlane.xlu0 %674
      %v676 = vsel %vm672, %v649, -inf
      %677 = vmax.xlane.f32.xlu0 %v676
      %v678 = vpop.xlane.xlu0 %677
      %v679 = vsel %vm672, %v650, -inf
      %680 = vmax.xlane.f32.xlu0 %v679
      %v681 = vpop.xlane.xlu0 %680
      %v682 = vsel %vm672, %v651, -inf
      %683 = vmax.xlane.f32.xlu0 %v682
      %v684 = vpop.xlane.xlu0 %683
      %v685 = vsel %vm672, %v652, -inf
      %686 = vmax.xlane.f32.xlu0 %v685
      %v687 = vpop.xlane.xlu0 %686
      %v688 = vsel %vm672, %v653, -inf
      %689 = vmax.xlane.f32.xlu0 %v688
      %v690 = vpop.xlane.xlu0 %689
      %v691 = vsel %vm672, %v654, -inf
      %692 = vmax.xlane.f32.xlu0 %v691
      %v693 = vpop.xlane.xlu0 %692
      %v694 = vsel %vm672, %v655, -inf
      %695 = vmax.xlane.f32.xlu0 %v694
      %v696 = vpop.xlane.xlu0 %695
      %v697 = vsel %vm672, %v656, -inf
      %698 = vmax.xlane.f32.xlu0 %v697
      %v699 = vpop.xlane.xlu0 %698
      %v700 = vsel %vm672, %v657, -inf
      %701 = vmax.xlane.f32.xlu0 %v700
      %v702 = vpop.xlane.xlu0 %701
      %v703 = vsel %vm672, %v658, -inf
      %704 = vmax.xlane.f32.xlu0 %v703
      %v705 = vpop.xlane.xlu0 %704
      %v706 = vsel %vm672, %v659, -inf
      %707 = vmax.xlane.f32.xlu0 %v706
      %v708 = vpop.xlane.xlu0 %707
      %v709 = vsel %vm672, %v660, -inf
      %710 = vmax.xlane.f32.xlu0 %v709
      %v711 = vpop.xlane.xlu0 %710
      %v712 = vsel %vm672, %v661, -inf
      %713 = vmax.xlane.f32.xlu0 %v712
      %v714 = vpop.xlane.xlu0 %713
      %v715 = vsel %vm672, %v662, -inf
      %716 = vmax.xlane.f32.xlu0 %v715
      %v717 = vpop.xlane.xlu0 %716
      %v718 = vsel %vm672, %v663, -inf
      %719 = vmax.xlane.f32.xlu0 %v718
      %v720 = vpop.xlane.xlu0 %719
      %v721 = vsub.f32 %v648, %v675
      %v722 = vsub.f32 %v649, %v678
      %v723 = vsub.f32 %v650, %v681
      %v724 = vsub.f32 %v651, %v684
      %v725 = vsub.f32 %v652, %v687
      %v726 = vsub.f32 %v653, %v690
      %v727 = vsub.f32 %v654, %v693
      %v728 = vsub.f32 %v655, %v696
      %v729 = vsub.f32 %v656, %v699
      %v730 = vsub.f32 %v657, %v702
      %v731 = vsub.f32 %v658, %v705
      %v732 = vsub.f32 %v659, %v708
      %v733 = vsub.f32 %v660, %v711
      %v734 = vsub.f32 %v661, %v714
      %v735 = vsub.f32 %v662, %v717
      %v736 = vsub.f32 %v663, %v720
      %v737 = vmul.f32 %v721, 1.442695
      %v738 = vpow.pop %v737
      %v739 = vmul.f32 %v722, 1.442695
      %v740 = vpow.pop %v739
      %v741 = vmul.f32 %v723, 1.442695
      %v742 = vpow.pop %v741
      %v743 = vmul.f32 %v724, 1.442695
      %v744 = vpow.pop %v743
      %v745 = vmul.f32 %v725, 1.442695
      %v746 = vpow.pop %v745
      %v747 = vmul.f32 %v726, 1.442695
      %v748 = vpow.pop %v747
      %v749 = vmul.f32 %v727, 1.442695
      %v750 = vpow.pop %v749
      %v751 = vmul.f32 %v728, 1.442695
      %v752 = vpow.pop %v751
      %v753 = vmul.f32 %v729, 1.442695
      %v754 = vpow.pop %v753
      %v755 = vmul.f32 %v730, 1.442695
      %v756 = vpow.pop %v755
      %v757 = vmul.f32 %v731, 1.442695
      %v758 = vpow.pop %v757
      %v759 = vmul.f32 %v732, 1.442695
      %v760 = vpow.pop %v759
      %v761 = vmul.f32 %v733, 1.442695
      %v762 = vpow.pop %v761
      %v763 = vmul.f32 %v734, 1.442695
      %v764 = vpow.pop %v763
      %v765 = vmul.f32 %v735, 1.442695
      %v766 = vpow.pop %v765
      %v767 = vmul.f32 %v736, 1.442695
      %v768 = vpow.pop %v767
      %v769 = vmul.f32 %v738, %v668
      %v770 = vmul.f32 %v740, %v669
      %v771 = vmul.f32 %v742, %v670
      %v772 = vmul.f32 %v744, %v671
      %v773 = vmul.f32 %v746, %v668
      %v774 = vmul.f32 %v748, %v669
      %v775 = vmul.f32 %v750, %v670
      %v776 = vmul.f32 %v752, %v671
      %v777 = vmul.f32 %v754, %v668
      %v778 = vmul.f32 %v756, %v669
      %v779 = vmul.f32 %v758, %v670
      %v780 = vmul.f32 %v760, %v671
      %v781 = vmul.f32 %v762, %v668
      %v782 = vmul.f32 %v764, %v669
      %v783 = vmul.f32 %v766, %v670
      %v784 = vmul.f32 %v768, %v671
      %v785 = vsel %vm672, %v769, 0.0
      %786 = vadd.xlane.f32.xlu0 %v785
      %v787 = vpop.xlane.xlu0 %786
      %v788 = vsel %vm672, %v770, 0.0
      %789 = vadd.xlane.f32.xlu0 %v788
      %v790 = vpop.xlane.xlu0 %789
      %v791 = vsel %vm672, %v771, 0.0
      %792 = vadd.xlane.f32.xlu0 %v791
      %v793 = vpop.xlane.xlu0 %792
      %v794 = vsel %vm672, %v772, 0.0
      %795 = vadd.xlane.f32.xlu0 %v794
      %v796 = vpop.xlane.xlu0 %795
      %v797 = vsel %vm672, %v773, 0.0
      %798 = vadd.xlane.f32.xlu0 %v797
      %v799 = vpop.xlane.xlu0 %798
      %v800 = vsel %vm672, %v774, 0.0
      %801 = vadd.xlane.f32.xlu0 %v800
      %v802 = vpop.xlane.xlu0 %801
      %v803 = vsel %vm672, %v775, 0.0
      %804 = vadd.xlane.f32.xlu0 %v803
      %v805 = vpop.xlane.xlu0 %804
      %v806 = vsel %vm672, %v776, 0.0
      %807 = vadd.xlane.f32.xlu0 %v806
      %v808 = vpop.xlane.xlu0 %807
      %v809 = vsel %vm672, %v777, 0.0
      %810 = vadd.xlane.f32.xlu0 %v809
      %v811 = vpop.xlane.xlu0 %810
      %v812 = vsel %vm672, %v778, 0.0
      %813 = vadd.xlane.f32.xlu0 %v812
      %v814 = vpop.xlane.xlu0 %813
      %v815 = vsel %vm672, %v779, 0.0
      %816 = vadd.xlane.f32.xlu0 %v815
      %v817 = vpop.xlane.xlu0 %816
      %v818 = vsel %vm672, %v780, 0.0
      %819 = vadd.xlane.f32.xlu0 %v818
      %v820 = vpop.xlane.xlu0 %819
      %v821 = vsel %vm672, %v781, 0.0
      %822 = vadd.xlane.f32.xlu0 %v821
      %v823 = vpop.xlane.xlu0 %822
      %v824 = vsel %vm672, %v782, 0.0
      %825 = vadd.xlane.f32.xlu0 %v824
      %v826 = vpop.xlane.xlu0 %825
      %v827 = vsel %vm672, %v783, 0.0
      %828 = vadd.xlane.f32.xlu0 %v827
      %v829 = vpop.xlane.xlu0 %828
      %v830 = vsel %vm672, %v784, 0.0
      %831 = vadd.xlane.f32.xlu0 %v830
      %v832 = vpop.xlane.xlu0 %831
      %v833 = vrcp.pop %v787
      %v834 = vrcp.pop %v790
      %v835 = vrcp.pop %v793
      %v836 = vrcp.pop %v796
      %v837 = vrcp.pop %v799
      %v838 = vrcp.pop %v802
      %v839 = vrcp.pop %v805
      %v840 = vrcp.pop %v808
      %v841 = vrcp.pop %v811
      %v842 = vrcp.pop %v814
      %v843 = vrcp.pop %v817
      %v844 = vrcp.pop %v820
      %v845 = vrcp.pop %v823
      %v846 = vrcp.pop %v826
      %v847 = vrcp.pop %v829
      %v848 = vrcp.pop %v832
      %v849 = vmul.f32 %v769, %v833
      %v850 = vmul.f32 %v770, %v834
      %v851 = vmul.f32 %v771, %v835
      %v852 = vmul.f32 %v772, %v836
      %v853 = vmul.f32 %v773, %v837
      %v854 = vmul.f32 %v774, %v838
      %v855 = vmul.f32 %v775, %v839
      %v856 = vmul.f32 %v776, %v840
      %v857 = vmul.f32 %v777, %v841
      %v858 = vmul.f32 %v778, %v842
      %v859 = vmul.f32 %v779, %v843
      %v860 = vmul.f32 %v780, %v844
      %v861 = vmul.f32 %v781, %v845
      %v862 = vmul.f32 %v782, %v846
      %v863 = vmul.f32 %v783, %v847
      %v864 = vmul.f32 %v784, %v848
      %v865 = vpack.c.bf16 %v849, %v849
      %v866 = vpack.c.bf16 %v850, %v850
      %v867 = vpack.c.bf16 %v851, %v851
      %v868 = vpack.c.bf16 %v852, %v852
      %v869 = vpack.c.bf16 %v853, %v853
      %v870 = vpack.c.bf16 %v854, %v854
      %v871 = vpack.c.bf16 %v855, %v855
      %v872 = vpack.c.bf16 %v856, %v856
      %v873 = vpack.c.bf16 %v857, %v857
      %v874 = vpack.c.bf16 %v858, %v858
      %v875 = vpack.c.bf16 %v859, %v859
      %v876 = vpack.c.bf16 %v860, %v860
      %v877 = vpack.c.bf16 %v861, %v861
      %v878 = vpack.c.bf16 %v862, %v862
      %v879 = vpack.c.bf16 %v863, %v863
      %v880 = vpack.c.bf16 %v864, %v864
      %v881 = vpack.c.bf16 %v327, %v327
      %v882 = vpack.c.bf16 %v329, %v329
      %v883 = vpack.c.bf16 %v332, %v332
      %v884 = vpack.c.bf16 %v334, %v334
      %v885 = vpack.c.bf16 %v337, %v337
      %v886 = vpack.c.bf16 %v339, %v339
      %v887 = vpack.c.bf16 %v342, %v342
      %v888 = vpack.c.bf16 %v344, %v344
      %v893 = vunpack.c.l.b16 %v865
      %v894 = vunpack.c.l.b16 %v866
      %v895 = vunpack.c.l.b16 %v867
      %v896 = vunpack.c.l.b16 %v868
      %v897 = vpack.c.b16 %v894, %v893
      %v898 = vpack.c.b16 %v896, %v895
      %v907 = vunpack.c.l.b16 %v881
      %v908 = vunpack.c.l.b16 %v882
      %v909 = vunpack.c.l.b16 %v883
      %v910 = vunpack.c.l.b16 %v884
      %v911 = vunpack.c.l.b16 %v885
      %v912 = vunpack.c.l.b16 %v886
      %v913 = vunpack.c.l.b16 %v887
      %v914 = vunpack.c.l.b16 %v888
      %v915 = vpack.c.b16 %v908, %v907
      %v916 = vpack.c.b16 %v910, %v909
      %v917 = vpack.c.b16 %v912, %v911
      %v918 = vpack.c.b16 %v914, %v913
      %v924 = vsel %vm672, %v897, 0
      %v927 = vsel %vm672, %v898, 0
      %929 = vmatpush.bf16.msra.mxu0 0
      %930 = vmatpush.bf16.msra.mxu0 0
      %931 = vmatpush.bf16.msra.mxu0 0
      %932 = vmatpush.bf16.msra.mxu0 0
      %933 = vmatpush.bf16.msra.mxu0 %v918
      %934 = vmatpush.bf16.msra.mxu0 %v917
      %935 = vmatpush.bf16.msra.mxu0 %v916
      %936 = vmatpush.bf16.msra.mxu0 %v915
      %937 = vmatmul.bf16.gmra.mxu0 %v924
      %v938 = vpop.f32.mrf.mxu0
      %v939 = vadd.f32 0.0, %v938
      %v940 = vpop.f32.mrf.mxu0
      %v941 = vadd.f32 0.0, %v940
      %942 = vmatmul.bf16.gmra.mxu0 %v927
      %v943 = vpop.f32.mrf.mxu0
      %v944 = vadd.f32 0.0, %v943
      %v945 = vpop.f32.mrf.mxu0
      %v946 = vadd.f32 0.0, %v945
      %947 = vdwg.mxu0
      %v952 = vunpack.c.l.b16 %v869
      %v953 = vunpack.c.l.b16 %v870
      %v954 = vunpack.c.l.b16 %v871
      %v955 = vunpack.c.l.b16 %v872
      %v956 = vpack.c.b16 %v953, %v952
      %v957 = vpack.c.b16 %v955, %v954
      %958 = vrot.lane.b32.xlu0 %v915, 120
      %v959 = vpop.permute.xlu0 %958
      %960 = vrot.lane.b32.xlu0 %v916, 120
      %v961 = vpop.permute.xlu0 %960
      %962 = vrot.lane.b32.xlu0 %v917, 120
      %v963 = vpop.permute.xlu0 %962
      %964 = vrot.lane.b32.xlu0 %v918, 120
      %v965 = vpop.permute.xlu0 %964
      %v971 = vsel %vm672, %v956, 0
      %v974 = vsel %vm672, %v957, 0
      %976 = vmatpush.bf16.msra.mxu0 0
      %977 = vmatpush.bf16.msra.mxu0 0
      %978 = vmatpush.bf16.msra.mxu0 0
      %979 = vmatpush.bf16.msra.mxu0 0
      %980 = vmatpush.bf16.msra.mxu0 %v965
      %981 = vmatpush.bf16.msra.mxu0 %v963
      %982 = vmatpush.bf16.msra.mxu0 %v961
      %983 = vmatpush.bf16.msra.mxu0 %v959
      %984 = vmatmul.bf16.gmra.mxu0 %v971
      %v985 = vpop.f32.mrf.mxu0
      %v986 = vadd.f32 0.0, %v985
      %v987 = vpop.f32.mrf.mxu0
      %v988 = vadd.f32 0.0, %v987
      %989 = vmatmul.bf16.gmra.mxu0 %v974
      %v990 = vpop.f32.mrf.mxu0
      %v991 = vadd.f32 0.0, %v990
      %v992 = vpop.f32.mrf.mxu0
      %v993 = vadd.f32 0.0, %v992
      %994 = vdwg.mxu0
      %v999 = vunpack.c.l.b16 %v873
      %v1000 = vunpack.c.l.b16 %v874
      %v1001 = vunpack.c.l.b16 %v875
      %v1002 = vunpack.c.l.b16 %v876
      %v1003 = vpack.c.b16 %v1000, %v999
      %v1004 = vpack.c.b16 %v1002, %v1001
      %1005 = vrot.lane.b32.xlu0 %v915, 112
      %v1006 = vpop.permute.xlu0 %1005
      %1007 = vrot.lane.b32.xlu0 %v916, 112
      %v1008 = vpop.permute.xlu0 %1007
      %1009 = vrot.lane.b32.xlu0 %v917, 112
      %v1010 = vpop.permute.xlu0 %1009
      %1011 = vrot.lane.b32.xlu0 %v918, 112
      %v1012 = vpop.permute.xlu0 %1011
      %v1018 = vsel %vm672, %v1003, 0
      %v1021 = vsel %vm672, %v1004, 0
      %1023 = vmatpush.bf16.msra.mxu0 0
      %1024 = vmatpush.bf16.msra.mxu0 0
      %1025 = vmatpush.bf16.msra.mxu0 0
      %1026 = vmatpush.bf16.msra.mxu0 0
      %1027 = vmatpush.bf16.msra.mxu0 %v1012
      %1028 = vmatpush.bf16.msra.mxu0 %v1010
      %1029 = vmatpush.bf16.msra.mxu0 %v1008
      %1030 = vmatpush.bf16.msra.mxu0 %v1006
      %1031 = vmatmul.bf16.gmra.mxu0 %v1018
      %v1032 = vpop.f32.mrf.mxu0
      %v1033 = vadd.f32 0.0, %v1032
      %v1034 = vpop.f32.mrf.mxu0
      %v1035 = vadd.f32 0.0, %v1034
      %1036 = vmatmul.bf16.gmra.mxu0 %v1021
      %v1037 = vpop.f32.mrf.mxu0
      %v1038 = vadd.f32 0.0, %v1037
      %v1039 = vpop.f32.mrf.mxu0
      %v1040 = vadd.f32 0.0, %v1039
      %1041 = vdwg.mxu0
      %v1046 = vunpack.c.l.b16 %v877
      %v1047 = vunpack.c.l.b16 %v878
      %v1048 = vunpack.c.l.b16 %v879
      %v1049 = vunpack.c.l.b16 %v880
      %v1050 = vpack.c.b16 %v1047, %v1046
      %v1051 = vpack.c.b16 %v1049, %v1048
      %1052 = vrot.lane.b32.xlu0 %v915, 104
      %v1053 = vpop.permute.xlu0 %1052
      %1054 = vrot.lane.b32.xlu0 %v916, 104
      %v1055 = vpop.permute.xlu0 %1054
      %1056 = vrot.lane.b32.xlu0 %v917, 104
      %v1057 = vpop.permute.xlu0 %1056
      %1058 = vrot.lane.b32.xlu0 %v918, 104
      %v1059 = vpop.permute.xlu0 %1058
      %v1065 = vsel %vm672, %v1050, 0
      %v1068 = vsel %vm672, %v1051, 0
      %1070 = vmatpush.bf16.msra.mxu0 0
      %1071 = vmatpush.bf16.msra.mxu0 0
      %1072 = vmatpush.bf16.msra.mxu0 0
      %1073 = vmatpush.bf16.msra.mxu0 0
      %1074 = vmatpush.bf16.msra.mxu0 %v1059
      %1075 = vmatpush.bf16.msra.mxu0 %v1057
      %1076 = vmatpush.bf16.msra.mxu0 %v1055
      %1077 = vmatpush.bf16.msra.mxu0 %v1053
      %1078 = vmatmul.bf16.gmra.mxu0 %v1065
      %v1079 = vpop.f32.mrf.mxu0
      %v1080 = vadd.f32 0.0, %v1079
      %v1081 = vpop.f32.mrf.mxu0
      %v1082 = vadd.f32 0.0, %v1081
      %1083 = vmatmul.bf16.gmra.mxu0 %v1068
      %v1084 = vpop.f32.mrf.mxu0
      %v1085 = vadd.f32 0.0, %v1084
      %v1086 = vpop.f32.mrf.mxu0
      %v1087 = vadd.f32 0.0, %v1086
      %1088 = vdwg.mxu0
      %1093 = vrot.lane.b32.xlu0 %v986, 8
      %v1094 = vpop.permute.xlu0 %1093
      %1095 = vrot.lane.b32.xlu0 %v988, 8
      %v1096 = vpop.permute.xlu0 %1095
      %1097 = vrot.lane.b32.xlu0 %v991, 8
      %v1098 = vpop.permute.xlu0 %1097
      %1099 = vrot.lane.b32.xlu0 %v993, 8
      %v1100 = vpop.permute.xlu0 %1099
      %1109 = vrot.lane.b32.xlu0 %v1033, 16
      %v1110 = vpop.permute.xlu0 %1109
      %1111 = vrot.lane.b32.xlu0 %v1035, 16
      %v1112 = vpop.permute.xlu0 %1111
      %1113 = vrot.lane.b32.xlu0 %v1038, 16
      %v1114 = vpop.permute.xlu0 %1113
      %1115 = vrot.lane.b32.xlu0 %v1040, 16
      %v1116 = vpop.permute.xlu0 %1115
      %1125 = vrot.lane.b32.xlu0 %v1080, 24
      %v1126 = vpop.permute.xlu0 %1125
      %1127 = vrot.lane.b32.xlu0 %v1082, 24
      %v1128 = vpop.permute.xlu0 %1127
      %1129 = vrot.lane.b32.xlu0 %v1085, 24
      %v1130 = vpop.permute.xlu0 %1129
      %1131 = vrot.lane.b32.xlu0 %v1087, 24
      %v1132 = vpop.permute.xlu0 %1131
      %vm1137 = vcmask 64512
      %v1138 = vsel %vm1137, %v939, %v1094
      %v1139 = vsel %vm1137, %v941, %v1096
      %v1140 = vsel %vm1137, %v944, %v1098
      %v1141 = vsel %vm1137, %v946, %v1100
      %v1142 = vsel %vm304, %v1138, %v1110
      %v1143 = vsel %vm304, %v1139, %v1112
      %v1144 = vsel %vm304, %v1140, %v1114
      %v1145 = vsel %vm304, %v1141, %v1116
      %vm1146 = vcmask 195584
      %v1147 = vsel %vm1146, %v1142, %v1126
      %v1148 = vsel %vm1146, %v1143, %v1128
      %v1149 = vsel %vm1146, %v1144, %v1130
      %v1150 = vsel %vm1146, %v1145, %v1132
      %v1151 = vld [vmem:[%s5] sm:$0x1]
      %v1153 = vperm.slane %v1151, 0
      %v1155 = vadd.f32 %v1147, %v1153
      %v1156 = vadd.f32 %v1148, %v1153
      %v1157 = vadd.f32 %v1149, %v1153
      %v1158 = vadd.f32 %v1150, %v1153
      %vm1159 = vcmp.gt.f32.partialorder %v1155, 0.0
      %vm1160 = vcmp.gt.f32.partialorder %v1156, 0.0
      %vm1161 = vcmp.gt.f32.partialorder %v1157, 0.0
      %vm1162 = vcmp.gt.f32.partialorder %v1158, 0.0
      %v1163 = vmul.f32 %v1155, 1.442695
      %v1164 = vpow.pop %v1163
      %v1165 = vmul.f32 %v1156, 1.442695
      %v1166 = vpow.pop %v1165
      %v1167 = vmul.f32 %v1157, 1.442695
      %v1168 = vpow.pop %v1167
      %v1169 = vmul.f32 %v1158, 1.442695
      %v1170 = vpow.pop %v1169
      %v1171 = vsub.f32 %v1164, 1.0
      %v1172 = vsub.f32 %v1166, 1.0
      %v1173 = vsub.f32 %v1168, 1.0
      %v1174 = vsub.f32 %v1170, 1.0
      %v1175 = vsel %vm1159, %v1155, %v1171
      %v1176 = vsel %vm1160, %v1156, %v1172
      %v1177 = vsel %vm1161, %v1157, %v1173
      %v1178 = vsel %vm1162, %v1158, %v1174
      %vm1179 = vcmask 261120
      %1180 = vst.msk [vmem:[%s275] sm:$0xff] %vm1179, %v1175
      %1181 = vst.msk [vmem:[%s275 + $0x8] sm:$0xff] %vm1179, %v1176
      %1182 = vst.msk [vmem:[%s275 + $0x10] sm:$0xff] %vm1179, %v1177
      %1183 = vst.msk [vmem:[%s275 + $0x18] sm:$0xff] %vm1179, %v1178
      %s1184 = smul.u32 4, %s17
      %p1185 = scmp.lt.s32.totalorder %s1184, 7
      %s1186 = scalar_select %p1185, %s1184, 7
      %s1187 = smul.addr %s1186, 8
      %s1188 = scalar_lea.vmem %s6, %s1187
      // Predicated region
      $region45: #{recommendation_gat_forward.2} parent=43 // pred_check
        %p1189 = pneg %p171
      $region46: #{recommendation_gat_forward.2} parent=43 // pred_check_branch
        %1191 = sbr.rel (%p1189) target = $region48
      $region47: #{recommendation_gat_forward.2} parent=43 // pred_region
        %s1192 = smul.u32 4, %s17
      $region48: #{recommendation_gat_forward.2} parent=43 // pred_fallthru
        _
    $region44: #{recommendation_gat_forward.2} parent=5 // pred_fallthru
      _
    %p1193 = scmp.le.s32.totalorder 2, %s12
    // Predicated region
    $region49: #{recommendation_gat_forward.2} parent=5 // pred_check
      %p1194 = pneg %p1193
    $region50: #{recommendation_gat_forward.2} parent=5 // pred_check_branch
      %1196 = sbr.rel (%p1194) target = $region52
    $region51: #{recommendation_gat_forward.2} parent=5 // pred_region
      %s1197 = ssub.s32 %s12, 2
      // Predicated region
      $region53: #{recommendation_gat_forward.2} parent=51 // pred_check
        %p1198 = pneg %p177
      $region54: #{recommendation_gat_forward.2} parent=51 // pred_check_branch
        %1200 = sbr.rel (%p1198) target = $region56
      $region55: #{recommendation_gat_forward.2} parent=51 // pred_region
        %s1201 = smul.u32 4, %s18
        %p1202 = scmp.lt.s32.totalorder %s1201, 7
        %s1203 = scalar_select %p1202, %s1201, 7
        %s1204 = smul.addr %s1203, 8
        %s1205 = scalar_lea.vmem %s6, %s1204
      $region56: #{recommendation_gat_forward.2} parent=51 // pred_fallthru
        _
    $region52: #{recommendation_gat_forward.2} parent=5 // pred_fallthru
      _
  $region6: #{recommendation_gat_forward.2} parent=0 // loop_footer
    %s16 = sadd.s32 1, %s12
  $region7: #{recommendation_gat_forward.2} parent=0 // loop_footer_branch
    %11 = sbr.rel target = $region3
  $region8: #{recommendation_gat_forward.2} parent=0 // loop_exit
    _

</llo_original>
